<compile_context>
chip_gen: v6e
topology: v6e:2x2x1
jax: 0.10.0
libtpu: 0.0.40
codegen_flags: <defaults>
</compile_context>

<pallas_src>
import numpy as np
import jax
import jax.numpy as jnp
from jax.experimental import pallas as pl
from jax.experimental.pallas import tpu as pltpu


# ------------------------------ fused kernel ------------------------------- #

def fused_net_kernel(x_ref, w1m_ref, b1_ref, w2m_ref, b2_ref,
                     fc1m_ref, fc1b_ref, fc2w_ref, fc2b_ref,
                     o_ref, cw1_scr, h1_scr, cw2_scr):
    bt = x_ref.shape[0]
    f32, bf16 = jnp.float32, jnp.bfloat16

    # ---- conv1 (1->10, k=5, 28->24) as 5 accumulated banded GEMMs ----------
    # lhs rows = (b, oh) on sublanes; contraction over the 28-wide W axis on
    # lanes; output column = (ow % 2)*128 + (ow // 2)*10 + co, i.e. the two
    # pooling phases live in separate 128-lane halves.
    acc1 = None
    for kh in range(5):
        xs = x_ref[:, pl.ds(kh, 24), :].reshape(bt * 24, 28).astype(bf16)
        p = jnp.dot(xs, w1m_ref[kh], preferred_element_type=f32)
        acc1 = p if acc1 is None else acc1 + p
    c1 = (acc1 + b1_ref[...]).reshape(bt, 24, 256)

    # ---- 2x2 max-pool + ReLU (24 -> 12) -------------------------------------
    cw1_scr[...] = jnp.maximum(c1[:, :, 0:128], c1[:, :, 128:256])   # W-max
    h1_scr[...] = jnp.maximum(                                        # H-max
        jnp.maximum(cw1_scr[:, pl.ds(0, 12, stride=2), :],
                    cw1_scr[:, pl.ds(1, 12, stride=2), :]), 0.0)
    # h1_scr: (bt, 12, 128), lane = pw*10 + ci (lanes 120..127 are zero)

    # ---- conv2 (10->20, k=5, 12->8); Dropout2d == identity (eval mode) -----
    acc2 = None
    for kh in range(5):
        hs = h1_scr[:, pl.ds(kh, 8), :].reshape(bt * 8, 128).astype(bf16)
        p = jnp.dot(hs, w2m_ref[kh], preferred_element_type=f32)
        acc2 = p if acc2 is None else acc2 + p
    c2 = (acc2 + b2_ref[...]).reshape(bt, 8, 256)

    # ---- 2x2 max-pool + ReLU (8 -> 4) ----------------------------------------
    cw2_scr[...] = jnp.maximum(c2[:, :, 0:128], c2[:, :, 128:256])
    h2 = jnp.maximum(
        jnp.maximum(cw2_scr[:, pl.ds(0, 4, stride=2), :],
                    cw2_scr[:, pl.ds(1, 4, stride=2), :]), 0.0)  # (bt, 4, 128)
    # h2 lane = pw2*20 + co (lanes 80..127 are zero)

    # ---- fc1 (320 -> 50) as 4 accumulated dots (no flatten relayout) -------
    hid = None
    for ph in range(4):
        p = jnp.dot(h2[:, ph, :].astype(bf16), fc1m_ref[ph],
                    preferred_element_type=f32)
        hid = p if hid is None else hid + p
    hid = jnp.maximum(hid + fc1b_ref[...], 0.0)        # F.dropout == identity

    # ---- fc2 (50 -> 10, lane-padded to 128) + log_softmax -------------------
    # Columns >= 10 have zero weights and a -1e9 bias, so they do not affect
    # max / sum-exp; the wrapper slices off the padded columns.
    logits = jnp.dot(hid.astype(bf16), fc2w_ref[...],
                     preferred_element_type=f32) + fc2b_ref[...]     # (bt, 128)
    z = logits - jnp.max(logits, axis=-1, keepdims=True)
    o_ref[...] = z - jnp.log(jnp.sum(jnp.exp(z), axis=-1, keepdims=True))


# ------------------------------ wrapper ------------------------------------ #

def net_forward(x_nchw, packed, *, bt_max=128):
    N = x_nchw.shape[0]
    assert x_nchw.shape[1:] == (1, 28, 28), x_nchw.shape
    x = x_nchw.reshape(N, 28, 28).astype(jnp.float32)   # drop C=1 (no lane pad)

    if N > bt_max:
        bt = bt_max                                      # multiple of 8
        G = (N + bt - 1) // bt                           # even G at N=256 -> v7x friendly
        Np = G * bt
        if Np != N:
            x = jnp.pad(x, ((0, Np - N), (0, 0), (0, 0)))
    else:
        bt, G, Np = N, 1, N

    def _full(shape):
        n = len(shape)
        return pl.BlockSpec(shape, lambda i, _n=n: (0,) * _n)   # VMEM-resident

    grid_spec = pltpu.PrefetchScalarGridSpec(
        num_scalar_prefetch=0,
        grid=(G,),
        in_specs=[
            pl.BlockSpec((bt, 28, 28), lambda i: (i, 0, 0)),    # streamed input
            _full((5, 28, 256)), _full((1, 256)),               # conv1 banded w, b
            _full((5, 128, 256)), _full((1, 256)),              # conv2 banded w, b
            _full((4, 128, 50)), _full((1, 50)),                # fc1 w, b
            _full((50, 128)), _full((1, 128)),                  # fc2 w, b(+pad)
        ],
        out_specs=pl.BlockSpec((bt, 128), lambda i: (i, 0)),    # lane-dense output
        scratch_shapes=[pltpu.VMEM((bt, 24, 128), jnp.float32),  # conv1 W-pooled
                        pltpu.VMEM((bt, 12, 128), jnp.float32),  # pooled act 1
                        pltpu.VMEM((bt, 8, 128), jnp.float32)],  # conv2 W-pooled
    )

    out = pl.pallas_call(
        fused_net_kernel,
        grid_spec=grid_spec,
        out_shape=jax.ShapeDtypeStruct((Np, 128), jnp.float32),
        compiler_params=pltpu.CompilerParams(
            dimension_semantics=("parallel",),
            vmem_limit_bytes=48 * 1024 * 1024),
    )(x, packed["w1m"], packed["b1bc"], packed["w2m"], packed["b2bc"],
      packed["fc1m"], packed["fc1b"], packed["fc2wp"], packed["fc2bp"])

    return out[:N, :10]


# --------------------------- parameter packing ----------------------------- #

def pack_params(tp):
    w1 = np.asarray(tp["w1"], np.float32)      # (10, 1, 5, 5)
    b1 = np.asarray(tp["b1"], np.float32)      # (10,)
    w2 = np.asarray(tp["w2"], np.float32)      # (20, 10, 5, 5)
    b2 = np.asarray(tp["b2"], np.float32)      # (20,)
    fc1w = np.asarray(tp["fc1_w"], np.float32)  # (50, 320)
    fc1b = np.asarray(tp["fc1_b"], np.float32)  # (50,)
    fc2w = np.asarray(tp["fc2_w"], np.float32)  # (10, 50)
    fc2b = np.asarray(tp["fc2_b"], np.float32)  # (10,)

    # conv1 banded weights: row = ow + kw in [0,28); col = (ow%2)*128 + (ow//2)*10 + co
    w1m = np.zeros((5, 28, 256), np.float32)
    b1bc = np.zeros((1, 256), np.float32)
    for ow in range(24):
        col = (ow % 2) * 128 + (ow // 2) * 10
        b1bc[0, col:col + 10] = b1
        for kh in range(5):
            for kw in range(5):
                w1m[kh, ow + kw, col:col + 10] = w1[:, 0, kh, kw]

    # conv2 banded weights: row = (ow+kw)*10 + ci in [0,120);
    #                       col = (ow%2)*128 + (ow//2)*20 + co
    w2m = np.zeros((5, 128, 256), np.float32)
    b2bc = np.zeros((1, 256), np.float32)
    for ow in range(8):
        col = (ow % 2) * 128 + (ow // 2) * 20
        b2bc[0, col:col + 20] = b2
        for kh in range(5):
            for kw in range(5):
                r = (ow + kw) * 10
                w2m[kh, r:r + 10, col:col + 20] = w2[:, :, kh, kw].T   # (ci, co)

    # fc1: fc1m[ph, pw*20 + co, j] = fc1_w[j, co*16 + ph*4 + pw]  (PyTorch flatten order)
    fc1m = np.zeros((4, 128, 50), np.float32)
    fc1m[:, :80, :] = np.transpose(fc1w.reshape(50, 20, 4, 4),
                                   (2, 3, 1, 0)).reshape(4, 80, 50)

    # fc2 lane-padded to 128 output columns; padded columns get a -1e9 bias.
    fc2wp = np.zeros((50, 128), np.float32)
    fc2wp[:, :10] = fc2w.T
    fc2bp = np.full((1, 128), -1e9, np.float32)
    fc2bp[0, :10] = fc2b

    bf16 = jnp.bfloat16
    return {
        "w1m": jnp.asarray(w1m, bf16), "b1bc": jnp.asarray(b1bc, jnp.float32),
        "w2m": jnp.asarray(w2m, bf16), "b2bc": jnp.asarray(b2bc, jnp.float32),
        "fc1m": jnp.asarray(fc1m, bf16), "fc1b": jnp.asarray(fc1b[None, :], jnp.float32),
        "fc2wp": jnp.asarray(fc2wp, bf16), "fc2bp": jnp.asarray(fc2bp, jnp.float32),
    }


def init_params(key):
    ks = jax.random.split(key, 8)
    s = 0.1
    tp = {   # PyTorch-layout parameters
        "w1": s * jax.random.normal(ks[0], (10, 1, 5, 5), jnp.float32),
        "b1": s * jax.random.normal(ks[1], (10,), jnp.float32),
        "w2": s * jax.random.normal(ks[2], (20, 10, 5, 5), jnp.float32),
        "b2": s * jax.random.normal(ks[3], (20,), jnp.float32),
        "fc1_w": s * jax.random.normal(ks[4], (50, 320), jnp.float32),
        "fc1_b": s * jax.random.normal(ks[5], (50,), jnp.float32),
        "fc2_w": s * jax.random.normal(ks[6], (10, 50), jnp.float32),
        "fc2_b": s * jax.random.normal(ks[7], (10,), jnp.float32),
    }
    return tp, pack_params(tp)


# ---------------------------- plain-JAX reference --------------------------- #

def _im2col_ref(x, k):
    # x: (N,H,W,C) NHWC -> (N,OH,OW,C*k*k) with PyTorch (ci,kh,kw) column order.
    N, H, W, C = x.shape
    OH, OW = H - k + 1, W - k + 1
    cols = [x[:, kh:kh + OH, kw:kw + OW, ci]
            for ci in range(C) for kh in range(k) for kw in range(k)]
    return jnp.stack(cols, axis=-1)


def net_forward_ref(x_nchw, tp):
    bf16, f32 = jnp.bfloat16, jnp.float32
    N = x_nchw.shape[0]
    x = jnp.transpose(x_nchw, (0, 2, 3, 1))
    p1 = _im2col_ref(x, 5).reshape(N * 576, 25)
    c1 = jnp.dot(p1.astype(bf16), tp["w1"].reshape(10, 25).T.astype(bf16),
                 preferred_element_type=f32).reshape(N, 24, 24, 10) + tp["b1"]
    h1 = jnp.maximum(c1.reshape(N, 12, 2, 12, 2, 10).max(axis=(2, 4)), 0.0)
    p2 = _im2col_ref(h1, 5).reshape(N * 64, 250)
    c2 = jnp.dot(p2.astype(bf16), tp["w2"].reshape(20, 250).T.astype(bf16),
                 preferred_element_type=f32).reshape(N, 8, 8, 20) + tp["b2"]
    h2 = jnp.maximum(c2.reshape(N, 4, 2, 4, 2, 20).max(axis=(2, 4)), 0.0)
    flat = jnp.transpose(h2, (0, 3, 1, 2)).reshape(N, 320)   # PyTorch x.view(-1,320)
    hid = jnp.maximum(jnp.dot(flat.astype(bf16), tp["fc1_w"].T.astype(bf16),
                              preferred_element_type=f32) + tp["fc1_b"], 0.0)
    logits = jnp.dot(hid.astype(bf16), tp["fc2_w"].T.astype(bf16),
                     preferred_element_type=f32) + tp["fc2_b"]
    z = logits - jnp.max(logits, axis=-1, keepdims=True)
    return z - jnp.log(jnp.sum(jnp.exp(z), axis=-1, keepdims=True))


# ----------------------------------- main ----------------------------------- #

if __name__ == "__main__":
    key = jax.random.PRNGKey(0)
    k_x, k_p = jax.random.split(key)
    torch_params, packed = init_params(k_p)

    # Small batch (single tile, bt = N) and a batched run that exercises the
    # bt=128 tile with an even 2-step grid (megacore-friendly on v7x).
    for n in (2, 256):
        x = jax.random.normal(jax.random.fold_in(k_x, n),
                              (n, 1, 28, 28), jnp.float32)
        out = jax.block_until_ready(net_forward(x, packed))
        ref = jax.block_until_ready(net_forward_ref(x, torch_params))
        assert out.shape == (n, 10), out.shape
        assert bool(jnp.all(jnp.isfinite(out)))
        max_diff = float(jnp.max(jnp.abs(out - ref)))
        assert bool(jnp.allclose(out, ref, atol=3e-2, rtol=3e-2)), (n, max_diff)

    print("KERNEL_OK")
</pallas_src>

<mosaic_0001>
module attributes {stable_mosaic.version = 11 : i64} {
  func.func @fused_net_kernel(%arg0: i32, %arg1: memref<2x28x28xf32, #tpu.memory_space<vmem>>, %arg2: memref<5x28x256xbf16, #tpu.memory_space<vmem>>, %arg3: memref<1x256xf32, #tpu.memory_space<vmem>>, %arg4: memref<5x128x256xbf16, #tpu.memory_space<vmem>>, %arg5: memref<1x256xf32, #tpu.memory_space<vmem>>, %arg6: memref<4x128x50xbf16, #tpu.memory_space<vmem>>, %arg7: memref<1x50xf32, #tpu.memory_space<vmem>>, %arg8: memref<50x128xbf16, #tpu.memory_space<vmem>>, %arg9: memref<1x128xf32, #tpu.memory_space<vmem>>, %arg10: memref<2x128xf32, #tpu.memory_space<vmem>>, %arg11: memref<2x24x128xf32, #tpu.memory_space<vmem>>, %arg12: memref<2x12x128xf32, #tpu.memory_space<vmem>>, %arg13: memref<2x8x128xf32, #tpu.memory_space<vmem>>) attributes {dimension_semantics = [#tpu.dimension_semantics<parallel>], iteration_bounds = array<i64: 1>, scalar_prefetch = 0 : i64, scratch_operands = 3 : i64, tpu.core_type = #tpu.core_type<tc>, window_params = [{transform_indices = @transform_0, window_bounds = array<i64: 2, 28, 28>}, {pipeline_mode = #tpu.pipeline_mode<synchronous>, transform_indices = @transform_1, window_bounds = array<i64: 5, 28, 256>}, {pipeline_mode = #tpu.pipeline_mode<synchronous>, transform_indices = @transform_2, window_bounds = array<i64: 1, 256>}, {pipeline_mode = #tpu.pipeline_mode<synchronous>, transform_indices = @transform_3, window_bounds = array<i64: 5, 128, 256>}, {pipeline_mode = #tpu.pipeline_mode<synchronous>, transform_indices = @transform_4, window_bounds = array<i64: 1, 256>}, {pipeline_mode = #tpu.pipeline_mode<synchronous>, transform_indices = @transform_5, window_bounds = array<i64: 4, 128, 50>}, {pipeline_mode = #tpu.pipeline_mode<synchronous>, transform_indices = @transform_6, window_bounds = array<i64: 1, 50>}, {pipeline_mode = #tpu.pipeline_mode<synchronous>, transform_indices = @transform_7, window_bounds = array<i64: 50, 128>}, {pipeline_mode = #tpu.pipeline_mode<synchronous>, transform_indices = @transform_8, window_bounds = array<i64: 1, 128>}, {transform_indices = @transform_9, window_bounds = array<i64: 2, 128>}]} {
    %c0 = arith.constant 0 : index
    %c0_0 = arith.constant 0 : index
    %c0_1 = arith.constant 0 : index
    %0 = vector.load %arg1[%c0, %c0_0, %c0_1] : memref<2x28x28xf32, #tpu.memory_space<vmem>>, vector<2x24x28xf32>
    %1 = vector.shape_cast %0 : vector<2x24x28xf32> to vector<48x28xf32>
    %2 = arith.truncf %1 : vector<48x28xf32> to vector<48x28xbf16>
    %c0_2 = arith.constant 0 : index
    %c0_3 = arith.constant 0 : index
    %c0_4 = arith.constant 0 : index
    %3 = vector.load %arg2[%c0_2, %c0_3, %c0_4] : memref<5x28x256xbf16, #tpu.memory_space<vmem>>, vector<1x28x256xbf16>
    %4 = vector.shape_cast %3 : vector<1x28x256xbf16> to vector<28x256xbf16>
    %cst = arith.constant dense<0.000000e+00> : vector<48x256xf32>
    %5 = tpu.matmul %2, %4, %cst {dimension_numbers = #tpu.dot_dimension_numbers<[1], [0], [0], [1], [0, 0, 1, 1], [], []>} : vector<48x28xbf16>, vector<28x256xbf16>, vector<48x256xf32> -> vector<48x256xf32>
    %c0_5 = arith.constant 0 : index
    %c1 = arith.constant 1 : index
    %c0_6 = arith.constant 0 : index
    %6 = vector.load %arg1[%c0_5, %c1, %c0_6] : memref<2x28x28xf32, #tpu.memory_space<vmem>>, vector<2x24x28xf32>
    %7 = vector.shape_cast %6 : vector<2x24x28xf32> to vector<48x28xf32>
    %8 = arith.truncf %7 : vector<48x28xf32> to vector<48x28xbf16>
    %c1_7 = arith.constant 1 : index
    %c0_8 = arith.constant 0 : index
    %c0_9 = arith.constant 0 : index
    %9 = vector.load %arg2[%c1_7, %c0_8, %c0_9] : memref<5x28x256xbf16, #tpu.memory_space<vmem>>, vector<1x28x256xbf16>
    %10 = vector.shape_cast %9 : vector<1x28x256xbf16> to vector<28x256xbf16>
    %cst_10 = arith.constant dense<0.000000e+00> : vector<48x256xf32>
    %11 = tpu.matmul %8, %10, %cst_10 {dimension_numbers = #tpu.dot_dimension_numbers<[1], [0], [0], [1], [0, 0, 1, 1], [], []>} : vector<48x28xbf16>, vector<28x256xbf16>, vector<48x256xf32> -> vector<48x256xf32>
    %12 = arith.addf %5, %11 : vector<48x256xf32>
    %c0_11 = arith.constant 0 : index
    %c2 = arith.constant 2 : index
    %c0_12 = arith.constant 0 : index
    %13 = vector.load %arg1[%c0_11, %c2, %c0_12] : memref<2x28x28xf32, #tpu.memory_space<vmem>>, vector<2x24x28xf32>
    %14 = vector.shape_cast %13 : vector<2x24x28xf32> to vector<48x28xf32>
    %15 = arith.truncf %14 : vector<48x28xf32> to vector<48x28xbf16>
    %c2_13 = arith.constant 2 : index
    %c0_14 = arith.constant 0 : index
    %c0_15 = arith.constant 0 : index
    %16 = vector.load %arg2[%c2_13, %c0_14, %c0_15] : memref<5x28x256xbf16, #tpu.memory_space<vmem>>, vector<1x28x256xbf16>
    %17 = vector.shape_cast %16 : vector<1x28x256xbf16> to vector<28x256xbf16>
    %cst_16 = arith.constant dense<0.000000e+00> : vector<48x256xf32>
    %18 = tpu.matmul %15, %17, %cst_16 {dimension_numbers = #tpu.dot_dimension_numbers<[1], [0], [0], [1], [0, 0, 1, 1], [], []>} : vector<48x28xbf16>, vector<28x256xbf16>, vector<48x256xf32> -> vector<48x256xf32>
    %19 = arith.addf %12, %18 : vector<48x256xf32>
    %c0_17 = arith.constant 0 : index
    %c3 = arith.constant 3 : index
    %c0_18 = arith.constant 0 : index
    %20 = vector.load %arg1[%c0_17, %c3, %c0_18] : memref<2x28x28xf32, #tpu.memory_space<vmem>>, vector<2x24x28xf32>
    %21 = vector.shape_cast %20 : vector<2x24x28xf32> to vector<48x28xf32>
    %22 = arith.truncf %21 : vector<48x28xf32> to vector<48x28xbf16>
    %c3_19 = arith.constant 3 : index
    %c0_20 = arith.constant 0 : index
    %c0_21 = arith.constant 0 : index
    %23 = vector.load %arg2[%c3_19, %c0_20, %c0_21] : memref<5x28x256xbf16, #tpu.memory_space<vmem>>, vector<1x28x256xbf16>
    %24 = vector.shape_cast %23 : vector<1x28x256xbf16> to vector<28x256xbf16>
    %cst_22 = arith.constant dense<0.000000e+00> : vector<48x256xf32>
    %25 = tpu.matmul %22, %24, %cst_22 {dimension_numbers = #tpu.dot_dimension_numbers<[1], [0], [0], [1], [0, 0, 1, 1], [], []>} : vector<48x28xbf16>, vector<28x256xbf16>, vector<48x256xf32> -> vector<48x256xf32>
    %26 = arith.addf %19, %25 : vector<48x256xf32>
    %c0_23 = arith.constant 0 : index
    %c4 = arith.constant 4 : index
    %c0_24 = arith.constant 0 : index
    %27 = vector.load %arg1[%c0_23, %c4, %c0_24] : memref<2x28x28xf32, #tpu.memory_space<vmem>>, vector<2x24x28xf32>
    %28 = vector.shape_cast %27 : vector<2x24x28xf32> to vector<48x28xf32>
    %29 = arith.truncf %28 : vector<48x28xf32> to vector<48x28xbf16>
    %c4_25 = arith.constant 4 : index
    %c0_26 = arith.constant 0 : index
    %c0_27 = arith.constant 0 : index
    %30 = vector.load %arg2[%c4_25, %c0_26, %c0_27] : memref<5x28x256xbf16, #tpu.memory_space<vmem>>, vector<1x28x256xbf16>
    %31 = vector.shape_cast %30 : vector<1x28x256xbf16> to vector<28x256xbf16>
    %cst_28 = arith.constant dense<0.000000e+00> : vector<48x256xf32>
    %32 = tpu.matmul %29, %31, %cst_28 {dimension_numbers = #tpu.dot_dimension_numbers<[1], [0], [0], [1], [0, 0, 1, 1], [], []>} : vector<48x28xbf16>, vector<28x256xbf16>, vector<48x256xf32> -> vector<48x256xf32>
    %33 = arith.addf %26, %32 : vector<48x256xf32>
    %c0_29 = arith.constant 0 : index
    %c0_30 = arith.constant 0 : index
    %34 = vector.load %arg3[%c0_29, %c0_30] : memref<1x256xf32, #tpu.memory_space<vmem>>, vector<1x256xf32>
    %35 = vector.broadcast %34 : vector<1x256xf32> to vector<48x256xf32>
    %36 = arith.addf %33, %35 : vector<48x256xf32>
    %37 = vector.shape_cast %36 : vector<48x256xf32> to vector<2x24x256xf32>
    %38 = vector.extract_strided_slice %37 {offsets = [0, 0, 0], sizes = [2, 24, 128], strides = [1, 1, 1]} : vector<2x24x256xf32> to vector<2x24x128xf32>
    %39 = vector.extract_strided_slice %37 {offsets = [0, 0, 128], sizes = [2, 24, 128], strides = [1, 1, 1]} : vector<2x24x256xf32> to vector<2x24x128xf32>
    %40 = arith.maximumf %38, %39 : vector<2x24x128xf32>
    %c0_31 = arith.constant 0 : index
    %c0_32 = arith.constant 0 : index
    %c0_33 = arith.constant 0 : index
    %41 = vector.load %arg11[%c0_31, %c0_32, %c0_33] : memref<2x24x128xf32, #tpu.memory_space<vmem>>, vector<2x24x128xf32>
    tpu.vector_store %arg11[%c0_31, %c0_32, %c0_33], %40 {strides = array<i32>} : memref<2x24x128xf32, #tpu.memory_space<vmem>>, vector<2x24x128xf32>,
    %c0_34 = arith.constant 0 : index
    %c0_35 = arith.constant 0 : index
    %c0_36 = arith.constant 0 : index
    %42 = tpu.strided_load %arg11[%c0_34, %c0_35, %c0_36] {strides = array<i32: 1, 2, 1>} : memref<2x24x128xf32, #tpu.memory_space<vmem>>, vector<2x12x128xf32>
    %c0_37 = arith.constant 0 : index
    %c1_38 = arith.constant 1 : index
    %c0_39 = arith.constant 0 : index
    %43 = tpu.strided_load %arg11[%c0_37, %c1_38, %c0_39] {strides = array<i32: 1, 2, 1>} : memref<2x24x128xf32, #tpu.memory_space<vmem>>, vector<2x12x128xf32>
    %44 = arith.maximumf %42, %43 : vector<2x12x128xf32>
    %cst_40 = arith.constant 0.000000e+00 : f32
    %45 = vector.broadcast %cst_40 : f32 to vector<2x12x128xf32>
    %46 = arith.maximumf %44, %45 : vector<2x12x128xf32>
    %c0_41 = arith.constant 0 : index
    %c0_42 = arith.constant 0 : index
    %c0_43 = arith.constant 0 : index
    %47 = vector.load %arg12[%c0_41, %c0_42, %c0_43] : memref<2x12x128xf32, #tpu.memory_space<vmem>>, vector<2x12x128xf32>
    tpu.vector_store %arg12[%c0_41, %c0_42, %c0_43], %46 {strides = array<i32>} : memref<2x12x128xf32, #tpu.memory_space<vmem>>, vector<2x12x128xf32>,
    %c0_44 = arith.constant 0 : index
    %c0_45 = arith.constant 0 : index
    %c0_46 = arith.constant 0 : index
    %48 = vector.load %arg12[%c0_44, %c0_45, %c0_46] : memref<2x12x128xf32, #tpu.memory_space<vmem>>, vector<2x8x128xf32>
    %49 = vector.shape_cast %48 : vector<2x8x128xf32> to vector<16x128xf32>
    %50 = arith.truncf %49 : vector<16x128xf32> to vector<16x128xbf16>
    %c0_47 = arith.constant 0 : index
    %c0_48 = arith.constant 0 : index
    %c0_49 = arith.constant 0 : index
    %51 = vector.load %arg4[%c0_47, %c0_48, %c0_49] : memref<5x128x256xbf16, #tpu.memory_space<vmem>>, vector<1x128x256xbf16>
    %52 = vector.shape_cast %51 : vector<1x128x256xbf16> to vector<128x256xbf16>
    %cst_50 = arith.constant dense<0.000000e+00> : vector<16x256xf32>
    %53 = tpu.matmul %50, %52, %cst_50 {dimension_numbers = #tpu.dot_dimension_numbers<[1], [0], [0], [1], [0, 0, 1, 1], [], []>} : vector<16x128xbf16>, vector<128x256xbf16>, vector<16x256xf32> -> vector<16x256xf32>
    %c0_51 = arith.constant 0 : index
    %c1_52 = arith.constant 1 : index
    %c0_53 = arith.constant 0 : index
    %54 = vector.load %arg12[%c0_51, %c1_52, %c0_53] : memref<2x12x128xf32, #tpu.memory_space<vmem>>, vector<2x8x128xf32>
    %55 = vector.shape_cast %54 : vector<2x8x128xf32> to vector<16x128xf32>
    %56 = arith.truncf %55 : vector<16x128xf32> to vector<16x128xbf16>
    %c1_54 = arith.constant 1 : index
    %c0_55 = arith.constant 0 : index
    %c0_56 = arith.constant 0 : index
    %57 = vector.load %arg4[%c1_54, %c0_55, %c0_56] : memref<5x128x256xbf16, #tpu.memory_space<vmem>>, vector<1x128x256xbf16>
    %58 = vector.shape_cast %57 : vector<1x128x256xbf16> to vector<128x256xbf16>
    %cst_57 = arith.constant dense<0.000000e+00> : vector<16x256xf32>
    %59 = tpu.matmul %56, %58, %cst_57 {dimension_numbers = #tpu.dot_dimension_numbers<[1], [0], [0], [1], [0, 0, 1, 1], [], []>} : vector<16x128xbf16>, vector<128x256xbf16>, vector<16x256xf32> -> vector<16x256xf32>
    %60 = arith.addf %53, %59 : vector<16x256xf32>
    %c0_58 = arith.constant 0 : index
    %c2_59 = arith.constant 2 : index
    %c0_60 = arith.constant 0 : index
    %61 = vector.load %arg12[%c0_58, %c2_59, %c0_60] : memref<2x12x128xf32, #tpu.memory_space<vmem>>, vector<2x8x128xf32>
    %62 = vector.shape_cast %61 : vector<2x8x128xf32> to vector<16x128xf32>
    %63 = arith.truncf %62 : vector<16x128xf32> to vector<16x128xbf16>
    %c2_61 = arith.constant 2 : index
    %c0_62 = arith.constant 0 : index
    %c0_63 = arith.constant 0 : index
    %64 = vector.load %arg4[%c2_61, %c0_62, %c0_63] : memref<5x128x256xbf16, #tpu.memory_space<vmem>>, vector<1x128x256xbf16>
    %65 = vector.shape_cast %64 : vector<1x128x256xbf16> to vector<128x256xbf16>
    %cst_64 = arith.constant dense<0.000000e+00> : vector<16x256xf32>
    %66 = tpu.matmul %63, %65, %cst_64 {dimension_numbers = #tpu.dot_dimension_numbers<[1], [0], [0], [1], [0, 0, 1, 1], [], []>} : vector<16x128xbf16>, vector<128x256xbf16>, vector<16x256xf32> -> vector<16x256xf32>
    %67 = arith.addf %60, %66 : vector<16x256xf32>
    %c0_65 = arith.constant 0 : index
    %c3_66 = arith.constant 3 : index
    %c0_67 = arith.constant 0 : index
    %68 = vector.load %arg12[%c0_65, %c3_66, %c0_67] : memref<2x12x128xf32, #tpu.memory_space<vmem>>, vector<2x8x128xf32>
    %69 = vector.shape_cast %68 : vector<2x8x128xf32> to vector<16x128xf32>
    %70 = arith.truncf %69 : vector<16x128xf32> to vector<16x128xbf16>
    %c3_68 = arith.constant 3 : index
    %c0_69 = arith.constant 0 : index
    %c0_70 = arith.constant 0 : index
    %71 = vector.load %arg4[%c3_68, %c0_69, %c0_70] : memref<5x128x256xbf16, #tpu.memory_space<vmem>>, vector<1x128x256xbf16>
    %72 = vector.shape_cast %71 : vector<1x128x256xbf16> to vector<128x256xbf16>
    %cst_71 = arith.constant dense<0.000000e+00> : vector<16x256xf32>
    %73 = tpu.matmul %70, %72, %cst_71 {dimension_numbers = #tpu.dot_dimension_numbers<[1], [0], [0], [1], [0, 0, 1, 1], [], []>} : vector<16x128xbf16>, vector<128x256xbf16>, vector<16x256xf32> -> vector<16x256xf32>
    %74 = arith.addf %67, %73 : vector<16x256xf32>
    %c0_72 = arith.constant 0 : index
    %c4_73 = arith.constant 4 : index
    %c0_74 = arith.constant 0 : index
    %75 = vector.load %arg12[%c0_72, %c4_73, %c0_74] : memref<2x12x128xf32, #tpu.memory_space<vmem>>, vector<2x8x128xf32>
    %76 = vector.shape_cast %75 : vector<2x8x128xf32> to vector<16x128xf32>
    %77 = arith.truncf %76 : vector<16x128xf32> to vector<16x128xbf16>
    %c4_75 = arith.constant 4 : index
    %c0_76 = arith.constant 0 : index
    %c0_77 = arith.constant 0 : index
    %78 = vector.load %arg4[%c4_75, %c0_76, %c0_77] : memref<5x128x256xbf16, #tpu.memory_space<vmem>>, vector<1x128x256xbf16>
    %79 = vector.shape_cast %78 : vector<1x128x256xbf16> to vector<128x256xbf16>
    %cst_78 = arith.constant dense<0.000000e+00> : vector<16x256xf32>
    %80 = tpu.matmul %77, %79, %cst_78 {dimension_numbers = #tpu.dot_dimension_numbers<[1], [0], [0], [1], [0, 0, 1, 1], [], []>} : vector<16x128xbf16>, vector<128x256xbf16>, vector<16x256xf32> -> vector<16x256xf32>
    %81 = arith.addf %74, %80 : vector<16x256xf32>
    %c0_79 = arith.constant 0 : index
    %c0_80 = arith.constant 0 : index
    %82 = vector.load %arg5[%c0_79, %c0_80] : memref<1x256xf32, #tpu.memory_space<vmem>>, vector<1x256xf32>
    %83 = vector.broadcast %82 : vector<1x256xf32> to vector<16x256xf32>
    %84 = arith.addf %81, %83 : vector<16x256xf32>
    %85 = vector.shape_cast %84 : vector<16x256xf32> to vector<2x8x256xf32>
    %86 = vector.extract_strided_slice %85 {offsets = [0, 0, 0], sizes = [2, 8, 128], strides = [1, 1, 1]} : vector<2x8x256xf32> to vector<2x8x128xf32>
    %87 = vector.extract_strided_slice %85 {offsets = [0, 0, 128], sizes = [2, 8, 128], strides = [1, 1, 1]} : vector<2x8x256xf32> to vector<2x8x128xf32>
    %88 = arith.maximumf %86, %87 : vector<2x8x128xf32>
    %c0_81 = arith.constant 0 : index
    %c0_82 = arith.constant 0 : index
    %c0_83 = arith.constant 0 : index
    %89 = vector.load %arg13[%c0_81, %c0_82, %c0_83] : memref<2x8x128xf32, #tpu.memory_space<vmem>>, vector<2x8x128xf32>
    tpu.vector_store %arg13[%c0_81, %c0_82, %c0_83], %88 {strides = array<i32>} : memref<2x8x128xf32, #tpu.memory_space<vmem>>, vector<2x8x128xf32>,
    %c0_84 = arith.constant 0 : index
    %c0_85 = arith.constant 0 : index
    %c0_86 = arith.constant 0 : index
    %90 = tpu.strided_load %arg13[%c0_84, %c0_85, %c0_86] {strides = array<i32: 1, 2, 1>} : memref<2x8x128xf32, #tpu.memory_space<vmem>>, vector<2x4x128xf32>
    %c0_87 = arith.constant 0 : index
    %c1_88 = arith.constant 1 : index
    %c0_89 = arith.constant 0 : index
    %91 = tpu.strided_load %arg13[%c0_87, %c1_88, %c0_89] {strides = array<i32: 1, 2, 1>} : memref<2x8x128xf32, #tpu.memory_space<vmem>>, vector<2x4x128xf32>
    %92 = arith.maximumf %90, %91 : vector<2x4x128xf32>
    %cst_90 = arith.constant 0.000000e+00 : f32
    %93 = vector.broadcast %cst_90 : f32 to vector<2x4x128xf32>
    %94 = arith.maximumf %92, %93 : vector<2x4x128xf32>
    %95 = vector.extract_strided_slice %94 {offsets = [0, 0, 0], sizes = [2, 1, 128], strides = [1, 1, 1]} : vector<2x4x128xf32> to vector<2x1x128xf32>
    %96 = vector.shape_cast %95 : vector<2x1x128xf32> to vector<2x128xf32>
    %97 = arith.truncf %96 : vector<2x128xf32> to vector<2x128xbf16>
    %c0_91 = arith.constant 0 : index
    %c0_92 = arith.constant 0 : index
    %c0_93 = arith.constant 0 : index
    %98 = vector.load %arg6[%c0_91, %c0_92, %c0_93] : memref<4x128x50xbf16, #tpu.memory_space<vmem>>, vector<1x128x50xbf16>
    %99 = vector.shape_cast %98 : vector<1x128x50xbf16> to vector<128x50xbf16>
    %cst_94 = arith.constant dense<0.000000e+00> : vector<2x50xf32>
    %100 = tpu.matmul %97, %99, %cst_94 {dimension_numbers = #tpu.dot_dimension_numbers<[1], [0], [0], [1], [0, 0, 1, 1], [], []>} : vector<2x128xbf16>, vector<128x50xbf16>, vector<2x50xf32> -> vector<2x50xf32>
    %101 = vector.extract_strided_slice %94 {offsets = [0, 1, 0], sizes = [2, 1, 128], strides = [1, 1, 1]} : vector<2x4x128xf32> to vector<2x1x128xf32>
    %102 = vector.shape_cast %101 : vector<2x1x128xf32> to vector<2x128xf32>
    %103 = arith.truncf %102 : vector<2x128xf32> to vector<2x128xbf16>
    %c1_95 = arith.constant 1 : index
    %c0_96 = arith.constant 0 : index
    %c0_97 = arith.constant 0 : index
    %104 = vector.load %arg6[%c1_95, %c0_96, %c0_97] : memref<4x128x50xbf16, #tpu.memory_space<vmem>>, vector<1x128x50xbf16>
    %105 = vector.shape_cast %104 : vector<1x128x50xbf16> to vector<128x50xbf16>
    %cst_98 = arith.constant dense<0.000000e+00> : vector<2x50xf32>
    %106 = tpu.matmul %103, %105, %cst_98 {dimension_numbers = #tpu.dot_dimension_numbers<[1], [0], [0], [1], [0, 0, 1, 1], [], []>} : vector<2x128xbf16>, vector<128x50xbf16>, vector<2x50xf32> -> vector<2x50xf32>
    %107 = arith.addf %100, %106 : vector<2x50xf32>
    %108 = vector.extract_strided_slice %94 {offsets = [0, 2, 0], sizes = [2, 1, 128], strides = [1, 1, 1]} : vector<2x4x128xf32> to vector<2x1x128xf32>
    %109 = vector.shape_cast %108 : vector<2x1x128xf32> to vector<2x128xf32>
    %110 = arith.truncf %109 : vector<2x128xf32> to vector<2x128xbf16>
    %c2_99 = arith.constant 2 : index
    %c0_100 = arith.constant 0 : index
    %c0_101 = arith.constant 0 : index
    %111 = vector.load %arg6[%c2_99, %c0_100, %c0_101] : memref<4x128x50xbf16, #tpu.memory_space<vmem>>, vector<1x128x50xbf16>
    %112 = vector.shape_cast %111 : vector<1x128x50xbf16> to vector<128x50xbf16>
    %cst_102 = arith.constant dense<0.000000e+00> : vector<2x50xf32>
    %113 = tpu.matmul %110, %112, %cst_102 {dimension_numbers = #tpu.dot_dimension_numbers<[1], [0], [0], [1], [0, 0, 1, 1], [], []>} : vector<2x128xbf16>, vector<128x50xbf16>, vector<2x50xf32> -> vector<2x50xf32>
    %114 = arith.addf %107, %113 : vector<2x50xf32>
    %115 = vector.extract_strided_slice %94 {offsets = [0, 3, 0], sizes = [2, 1, 128], strides = [1, 1, 1]} : vector<2x4x128xf32> to vector<2x1x128xf32>
    %116 = vector.shape_cast %115 : vector<2x1x128xf32> to vector<2x128xf32>
    %117 = arith.truncf %116 : vector<2x128xf32> to vector<2x128xbf16>
    %c3_103 = arith.constant 3 : index
    %c0_104 = arith.constant 0 : index
    %c0_105 = arith.constant 0 : index
    %118 = vector.load %arg6[%c3_103, %c0_104, %c0_105] : memref<4x128x50xbf16, #tpu.memory_space<vmem>>, vector<1x128x50xbf16>
    %119 = vector.shape_cast %118 : vector<1x128x50xbf16> to vector<128x50xbf16>
    %cst_106 = arith.constant dense<0.000000e+00> : vector<2x50xf32>
    %120 = tpu.matmul %117, %119, %cst_106 {dimension_numbers = #tpu.dot_dimension_numbers<[1], [0], [0], [1], [0, 0, 1, 1], [], []>} : vector<2x128xbf16>, vector<128x50xbf16>, vector<2x50xf32> -> vector<2x50xf32>
    %121 = arith.addf %114, %120 : vector<2x50xf32>
    %c0_107 = arith.constant 0 : index
    %c0_108 = arith.constant 0 : index
    %122 = vector.load %arg7[%c0_107, %c0_108] : memref<1x50xf32, #tpu.memory_space<vmem>>, vector<1x50xf32>
    %123 = vector.broadcast %122 : vector<1x50xf32> to vector<2x50xf32>
    %124 = arith.addf %121, %123 : vector<2x50xf32>
    %cst_109 = arith.constant 0.000000e+00 : f32
    %125 = vector.broadcast %cst_109 : f32 to vector<2x50xf32>
    %126 = arith.maximumf %124, %125 : vector<2x50xf32>
    %127 = arith.truncf %126 : vector<2x50xf32> to vector<2x50xbf16>
    %c0_110 = arith.constant 0 : index
    %c0_111 = arith.constant 0 : index
    %128 = vector.load %arg8[%c0_110, %c0_111] : memref<50x128xbf16, #tpu.memory_space<vmem>>, vector<50x128xbf16>
    %cst_112 = arith.constant dense<0.000000e+00> : vector<2x128xf32>
    %129 = tpu.matmul %127, %128, %cst_112 {dimension_numbers = #tpu.dot_dimension_numbers<[1], [0], [0], [1], [0, 0, 1, 1], [], []>} : vector<2x50xbf16>, vector<50x128xbf16>, vector<2x128xf32> -> vector<2x128xf32>
    %c0_113 = arith.constant 0 : index
    %c0_114 = arith.constant 0 : index
    %130 = vector.load %arg9[%c0_113, %c0_114] : memref<1x128xf32, #tpu.memory_space<vmem>>, vector<1x128xf32>
    %131 = vector.broadcast %130 : vector<1x128xf32> to vector<2x128xf32>
    %132 = arith.addf %129, %131 : vector<2x128xf32>
    %cst_115 = arith.constant dense<0xFF800000> : vector<2xf32>
    %133 = vector.multi_reduction <maximumf>, %132, %cst_115 [1] : vector<2x128xf32> to vector<2xf32>
    %134 = vector.shape_cast %133 : vector<2xf32> to vector<2x1xf32>
    %135 = vector.broadcast %134 : vector<2x1xf32> to vector<2x128xf32>
    %136 = arith.subf %132, %135 : vector<2x128xf32>
    %137 = math.exp %136 : vector<2x128xf32>
    %cst_116 = arith.constant dense<0.000000e+00> : vector<2xf32>
    %138 = vector.multi_reduction <add>, %137, %cst_116 [1] : vector<2x128xf32> to vector<2xf32>
    %139 = vector.shape_cast %138 : vector<2xf32> to vector<2x1xf32>
    %140 = math.log %139 : vector<2x1xf32>
    %141 = vector.broadcast %140 : vector<2x1xf32> to vector<2x128xf32>
    %142 = arith.subf %136, %141 : vector<2x128xf32>
    %c0_117 = arith.constant 0 : index
    %c0_118 = arith.constant 0 : index
    %143 = vector.load %arg10[%c0_117, %c0_118] : memref<2x128xf32, #tpu.memory_space<vmem>>, vector<2x128xf32>
    tpu.vector_store %arg10[%c0_117, %c0_118], %142 {strides = array<i32>} : memref<2x128xf32, #tpu.memory_space<vmem>>, vector<2x128xf32>,
    return
  }
  func.func @transform_0(%arg0: i32) -> (i32, i32, i32) {
    %c0_i32 = arith.constant 0 : i32
    %c0_i32_0 = arith.constant 0 : i32
    %c0_i32_1 = arith.constant 0 : i32
    return %arg0, %c0_i32, %c0_i32_0 : i32, i32, i32
  }
  func.func @transform_1(%arg0: i32) -> (i32, i32, i32) {
    %c0_i32 = arith.constant 0 : i32
    %c0_i32_0 = arith.constant 0 : i32
    %c0_i32_1 = arith.constant 0 : i32
    %c0_i32_2 = arith.constant 0 : i32
    return %c0_i32, %c0_i32_0, %c0_i32_1 : i32, i32, i32
  }
  func.func @transform_2(%arg0: i32) -> (i32, i32) {
    %c0_i32 = arith.constant 0 : i32
    %c0_i32_0 = arith.constant 0 : i32
    %c0_i32_1 = arith.constant 0 : i32
    return %c0_i32, %c0_i32_0 : i32, i32
  }
  func.func @transform_3(%arg0: i32) -> (i32, i32, i32) {
    %c0_i32 = arith.constant 0 : i32
    %c0_i32_0 = arith.constant 0 : i32
    %c0_i32_1 = arith.constant 0 : i32
    %c0_i32_2 = arith.constant 0 : i32
    return %c0_i32, %c0_i32_0, %c0_i32_1 : i32, i32, i32
  }
  func.func @transform_4(%arg0: i32) -> (i32, i32) {
    %c0_i32 = arith.constant 0 : i32
    %c0_i32_0 = arith.constant 0 : i32
    %c0_i32_1 = arith.constant 0 : i32
    return %c0_i32, %c0_i32_0 : i32, i32
  }
  func.func @transform_5(%arg0: i32) -> (i32, i32, i32) {
    %c0_i32 = arith.constant 0 : i32
    %c0_i32_0 = arith.constant 0 : i32
    %c0_i32_1 = arith.constant 0 : i32
    %c0_i32_2 = arith.constant 0 : i32
    return %c0_i32, %c0_i32_0, %c0_i32_1 : i32, i32, i32
  }
  func.func @transform_6(%arg0: i32) -> (i32, i32) {
    %c0_i32 = arith.constant 0 : i32
    %c0_i32_0 = arith.constant 0 : i32
    %c0_i32_1 = arith.constant 0 : i32
    return %c0_i32, %c0_i32_0 : i32, i32
  }
  func.func @transform_7(%arg0: i32) -> (i32, i32) {
    %c0_i32 = arith.constant 0 : i32
    %c0_i32_0 = arith.constant 0 : i32
    %c0_i32_1 = arith.constant 0 : i32
    return %c0_i32, %c0_i32_0 : i32, i32
  }
  func.func @transform_8(%arg0: i32) -> (i32, i32) {
    %c0_i32 = arith.constant 0 : i32
    %c0_i32_0 = arith.constant 0 : i32
    %c0_i32_1 = arith.constant 0 : i32
    return %c0_i32, %c0_i32_0 : i32, i32
  }
  func.func @transform_9(%arg0: i32) -> (i32, i32) {
    %c0_i32 = arith.constant 0 : i32
    %c0_i32_0 = arith.constant 0 : i32
    return %arg0, %c0_i32 : i32, i32
  }
}

</mosaic_0001>

<llo_original>
// kernel: tpu_custom_call.1
$region0: #{tpu_custom_call.1}
  #allocation0 [shape = 'u32[]', space=smem, size = 0x4, offset = 0x4, fixed_abs, tag = 'smem constant byte address 0x4 - core index']
  #allocation1 [shape = 'u32[144,128]{1,0:T(1,128)}', space=vmem, size = 0x12000, scoped, tag = 'internal scratch']
  #allocation2 [shape = 'f32[2,24,128]{2,1,0:T(8,128)}', space=vmem, size = 0x6000, scoped, tag = 'scratch operand']
  #allocation3 [shape = 'f32[2,12,128]{2,1,0:T(8,128)}', space=vmem, size = 0x4000, scoped, tag = 'scratch operand']
  #allocation4 [shape = 'f32[2,8,128]{2,1,0:T(8,128)}', space=vmem, size = 0x2000, scoped, tag = 'scratch operand']
  %s0 = inlined_call_operand.vmem [shape: f32[2,28,28], index: 0, kind: input, shape index: {}]
  %s1 = inlined_call_operand.vmem [shape: bf16[5,28,256], index: 1, kind: input, shape index: {}]
  %s2 = inlined_call_operand.vmem [shape: f32[1,256], index: 2, kind: input, shape index: {}]
  %s3 = inlined_call_operand.hbm [shape: bf16[5,128,256], index: 3, kind: input, shape index: {}]
  %s4 = inlined_call_operand.vmem [shape: f32[1,256], index: 4, kind: input, shape index: {}]
  %s5 = inlined_call_operand.vmem [shape: bf16[4,128,50], index: 5, kind: input, shape index: {}]
  %s6 = inlined_call_operand.vmem [shape: f32[1,50], index: 6, kind: input, shape index: {}]
  %s7 = inlined_call_operand.vmem [shape: bf16[50,128], index: 7, kind: input, shape index: {}]
  %s8 = inlined_call_operand.vmem [shape: f32[1,128], index: 8, kind: input, shape index: {}]
  %s9 = inlined_call_operand.hbm [shape: f32[2,128], index: 9, kind: output, shape index: {}]
  %s10 = sld [smem:[#allocation0]]
  $region50: #{tpu_custom_call.1} parent=0
    _
  %s12 = ssub.s32 1, %s10
  %s13 = scalar_select 0, %s12, %s10
  $region1: #{tpu_custom_call.1} parent=0
    #allocation5 [shape = 'u8[327680]{0}', space=vmem, size = 0x50000, scoped, tag = 'input window, operand 3, single buffered']
    #allocation6 [shape = 's32[1]{0}', space=sflag, size = 0x4, scoped, tag = 'scoped memory for tpu_custom_call.1']
    #allocation7 [shape = 's32[1]{0}', space=sflag, size = 0x4, scoped, tag = 'scoped memory for tpu_custom_call.1']
    #allocation8 [shape = 'u8[1024]{0}', space=vmem, size = 0x400, scoped, tag = 'output window, operand 0, single buffered']
    %14 = vsyncpa [#allocation6], 0
    %15 = vsyncpa [#allocation7], 0
    // Predicated region
    $region2: #{tpu_custom_call.1} parent=1 // pred_check
      _
    $region3: #{tpu_custom_call.1} parent=1 // pred_check_branch
      %17 = sbr.rel (0) target = $region5
    $region4: #{tpu_custom_call.1} parent=1 // pred_region
      _
    $region5: #{tpu_custom_call.1} parent=1 // pred_fallthru
      _
    // Predicated region
    $region6: #{tpu_custom_call.1} parent=1 // pred_check
      _
    $region7: #{tpu_custom_call.1} parent=1 // pred_check_branch
      %19 = sbr.rel (0) target = $region9
    $region8: #{tpu_custom_call.1} parent=1 // pred_region
      _
    $region9: #{tpu_custom_call.1} parent=1 // pred_fallthru
      _
    // Predicated region
    $region10: #{tpu_custom_call.1} parent=1 // pred_check
      _
    $region11: #{tpu_custom_call.1} parent=1 // pred_check_branch
      %21 = sbr.rel (0) target = $region13
    $region12: #{tpu_custom_call.1} parent=1 // pred_region
      _
    $region13: #{tpu_custom_call.1} parent=1 // pred_fallthru
      _
    // Predicated region
    $region14: #{tpu_custom_call.1} parent=1 // pred_check
      _
    $region15: #{tpu_custom_call.1} parent=1 // pred_check_branch
      %23 = sbr.rel (0) target = $region17
    $region16: #{tpu_custom_call.1} parent=1 // pred_region
      %s25 = ssub.s32 10240, 10240
      %26 = vsyncadd [#allocation6], %s25
      %s27 = sshll.u32 [#allocation5], 4
      %s28 = int_to_ptr.vmem [resolvable:$true] %s27
      %33 = dma.hbm_to_vmem [thread:$0]  %s3, 10240, %s28, [#allocation6], 128, 128, 8
    $region17: #{tpu_custom_call.1} parent=1 // pred_fallthru
      _
    // Predicated region
    $region18: #{tpu_custom_call.1} parent=1 // pred_check
      _
    $region19: #{tpu_custom_call.1} parent=1 // pred_check_branch
      %35 = sbr.rel (0) target = $region21
    $region20: #{tpu_custom_call.1} parent=1 // pred_region
      _
    $region21: #{tpu_custom_call.1} parent=1 // pred_fallthru
      _
    // Predicated region
    $region22: #{tpu_custom_call.1} parent=1 // pred_check
      _
    $region23: #{tpu_custom_call.1} parent=1 // pred_check_branch
      %37 = sbr.rel (0) target = $region25
    $region24: #{tpu_custom_call.1} parent=1 // pred_region
      _
    $region25: #{tpu_custom_call.1} parent=1 // pred_fallthru
      _
    // Predicated region
    $region26: #{tpu_custom_call.1} parent=1 // pred_check
      _
    $region27: #{tpu_custom_call.1} parent=1 // pred_check_branch
      %39 = sbr.rel (0) target = $region29
    $region28: #{tpu_custom_call.1} parent=1 // pred_region
      _
    $region29: #{tpu_custom_call.1} parent=1 // pred_fallthru
      _
    // Predicated region
    $region30: #{tpu_custom_call.1} parent=1 // pred_check
      _
    $region31: #{tpu_custom_call.1} parent=1 // pred_check_branch
      %41 = sbr.rel (0) target = $region33
    $region32: #{tpu_custom_call.1} parent=1 // pred_region
      _
    $region33: #{tpu_custom_call.1} parent=1 // pred_fallthru
      _
    // Predicated region
    $region34: #{tpu_custom_call.1} parent=1 // pred_check
      _
    $region35: #{tpu_custom_call.1} parent=1 // pred_check_branch
      %43 = sbr.rel (0) target = $region37
    $region36: #{tpu_custom_call.1} parent=1 // pred_region
      _
    $region37: #{tpu_custom_call.1} parent=1 // pred_fallthru
      _
    // Predicated region
    $region38: #{tpu_custom_call.1} parent=1 // pred_check
      _
    $region39: #{tpu_custom_call.1} parent=1 // pred_check_branch
      %45 = sbr.rel (0) target = $region41
    $region40: #{tpu_custom_call.1} parent=1 // pred_region
      %46 = dma.done [#allocation6], 10240
    $region41: #{tpu_custom_call.1} parent=1 // pred_fallthru
      _
    %v48 = vld [vmem:[%s0] sm:$0xff]
    %v49 = vld [vmem:[%s0 + $0x8] sm:$0xff]
    %v50 = vld [vmem:[%s0 + $0x10] sm:$0xff]
    %v51 = vld [vmem:[%s0 + $0x20] sm:$0xff]
    %v52 = vld [vmem:[%s0 + $0x28] sm:$0xff]
    %v53 = vld [vmem:[%s0 + $0x30] sm:$0xff]
    %v54 = vpack.c.bf16 %v49, %v48
    %v55 = vpack.c.bf16 %v51, %v50
    %v56 = vpack.c.bf16 %v53, %v52
    %v57 = vld [vmem:[%s1] sm:$0xff]
    %v58 = vld [vmem:[%s1 + $0x8] sm:$0xff]
    %v59 = vld [vmem:[%s1 + $0x10] sm:$0xff]
    %v60 = vld [vmem:[%s1 + $0x18] sm:$0x33]
    %v61 = vld [vmem:[%s0 + $0x1] sm:$0xff]
    %v62 = vld [vmem:[%s0 + $0x9] sm:$0xff]
    %v63 = vld [vmem:[%s0 + $0x11] sm:$0xff]
    %v64 = vld [vmem:[%s0 + $0x21] sm:$0xff]
    %v65 = vld [vmem:[%s0 + $0x29] sm:$0xff]
    %v66 = vld [vmem:[%s0 + $0x31] sm:$0xff]
    %v67 = vpack.c.bf16 %v62, %v61
    %v68 = vpack.c.bf16 %v64, %v63
    %v69 = vpack.c.bf16 %v66, %v65
    %s70 = scalar_lea.vmem %s1, 32
    %v71 = vld [vmem:[%s70] sm:$0xff]
    %v72 = vld [vmem:[%s70 + $0x8] sm:$0xff]
    %v73 = vld [vmem:[%s70 + $0x10] sm:$0xff]
    %v74 = vld [vmem:[%s70 + $0x18] sm:$0x33]
    %v79 = vunpack.c.l.b16 %v71
    %v80 = vunpack.c.h.b16 %v71
    %v81 = vunpack.c.l.b16 %v72
    %v82 = vunpack.c.h.b16 %v72
    %v83 = vunpack.c.l.b16 %v73
    %v84 = vunpack.c.h.b16 %v73
    %v85 = vunpack.c.l.b16 %v74
    %v86 = vunpack.c.h.b16 %v74
    %v87 = vpack.c.b16 %v81, %v79
    %v88 = vpack.c.b16 %v82, %v80
    %v89 = vpack.c.b16 %v85, %v83
    %v90 = vpack.c.b16 %v86, %v84
    %vm93 = vcmask 228352
    %v95 = vsel %vm93, %v67, 0
    %v98 = vsel %vm93, %v68, 0
    %v101 = vsel %vm93, %v69, 0
    %vm103 = vcmask 1045504
    %v105 = vsel %vm103, %v89, 0
    %v108 = vsel %vm103, %v90, 0
    %110 = vmatprep.subr.bf16.mxu0 0
    %111 = vmatpush1.bf16.msra.mxu0 0
    %112 = vmatprep.subr.bf16.mxu0 0
    %113 = vmatpush1.bf16.msra.mxu0 0
    %114 = vmatprep.subr.bf16.mxu0 0
    %115 = vmatpush1.bf16.msra.mxu0 0
    %116 = vmatprep.subr.bf16.mxu0 0
    %117 = vmatpush1.bf16.msra.mxu0 0
    %118 = vmatprep.subr.bf16.mxu0 0
    %119 = vmatpush1.bf16.msra.mxu0 0
    %120 = vmatprep.subr.bf16.mxu0 0
    %121 = vmatpush1.bf16.msra.mxu0 0
    %122 = vmatprep.subr.bf16.mxu0 %v108
    %123 = vmatpush1.bf16.msra.mxu0 %v105
    %124 = vmatprep.subr.bf16.mxu0 %v88
    %125 = vmatpush1.bf16.msra.mxu0 %v87
    %126 = vmatprep.subr.bf16.mxu0 0
    %127 = vmatpush2.bf16.msra.mxu0 0
    %128 = vmatprep.subr.bf16.mxu0 0
    %129 = vmatpush2.bf16.msra.mxu0 0
    %130 = vmatprep.subr.bf16.mxu0 0
    %131 = vmatpush2.bf16.msra.mxu0 0
    %132 = vmatprep.subr.bf16.mxu0 0
    %133 = vmatpush2.bf16.msra.mxu0 0
    %134 = vmatprep.subr.bf16.mxu0 0
    %135 = vmatpush2.bf16.msra.mxu0 0
    %136 = vmatprep.subr.bf16.mxu0 0
    %137 = vmatpush2.bf16.msra.mxu0 0
    %138 = vmatprep.subr.bf16.mxu0 0
    %139 = vmatpush2.bf16.msra.mxu0 0
    %140 = vmatprep.subr.bf16.mxu0 0
    %141 = vmatpush2.bf16.msra.mxu0 0
    %142 = vmatprep.mubr.bf16.mxu0 0
    %143 = vmatmul.mubr.bf16.gmra.mxu0 %v95
    %v144 = vpop.f32.mrf.mxu0
    %v145 = vadd.f32 0.0, %v144
    %v146 = vpop.f32.mrf.mxu0
    %v147 = vadd.f32 0.0, %v146
    %v148 = vpop.f32.mrf.mxu0
    %v149 = vadd.f32 0.0, %v148
    %v150 = vpop.f32.mrf.mxu0
    %v151 = vadd.f32 0.0, %v150
    %152 = vmatprep.mubr.bf16.mxu0 0
    %153 = vmatmul.mubr.bf16.gmra.mxu0 %v98
    %v154 = vpop.f32.mrf.mxu0
    %v155 = vadd.f32 0.0, %v154
    %v156 = vpop.f32.mrf.mxu0
    %v157 = vadd.f32 0.0, %v156
    %v158 = vpop.f32.mrf.mxu0
    %v159 = vadd.f32 0.0, %v158
    %v160 = vpop.f32.mrf.mxu0
    %v161 = vadd.f32 0.0, %v160
    %162 = vmatprep.mubr.bf16.mxu0 0
    %163 = vmatmul.mubr.bf16.gmra.mxu0 %v101
    %v164 = vpop.f32.mrf.mxu0
    %v165 = vadd.f32 0.0, %v164
    %v166 = vpop.f32.mrf.mxu0
    %v167 = vadd.f32 0.0, %v166
    %v168 = vpop.f32.mrf.mxu0
    %v169 = vadd.f32 0.0, %v168
    %v170 = vpop.f32.mrf.mxu0
    %v171 = vadd.f32 0.0, %v170
    %172 = vdwg.mxu0
    %v177 = vunpack.c.l.b16 %v57
    %v178 = vunpack.c.h.b16 %v57
    %v179 = vunpack.c.l.b16 %v58
    %v180 = vunpack.c.h.b16 %v58
    %v181 = vunpack.c.l.b16 %v59
    %v182 = vunpack.c.h.b16 %v59
    %v183 = vunpack.c.l.b16 %v60
    %v184 = vunpack.c.h.b16 %v60
    %v185 = vpack.c.b16 %v179, %v177
    %v186 = vpack.c.b16 %v180, %v178
    %v187 = vpack.c.b16 %v183, %v181
    %v188 = vpack.c.b16 %v184, %v182
    %v192 = vsel %vm93, %v54, 0
    %v195 = vsel %vm93, %v55, 0
    %v198 = vsel %vm93, %v56, 0
    %v201 = vsel %vm103, %v187, 0
    %v204 = vsel %vm103, %v188, 0
    %206 = vmatprep.subr.bf16.mxu0 0
    %207 = vmatpush1.bf16.msra.mxu0 0
    %208 = vmatprep.subr.bf16.mxu0 0
    %209 = vmatpush1.bf16.msra.mxu0 0
    %210 = vmatprep.subr.bf16.mxu0 0
    %211 = vmatpush1.bf16.msra.mxu0 0
    %212 = vmatprep.subr.bf16.mxu0 0
    %213 = vmatpush1.bf16.msra.mxu0 0
    %214 = vmatprep.subr.bf16.mxu0 0
    %215 = vmatpush1.bf16.msra.mxu0 0
    %216 = vmatprep.subr.bf16.mxu0 0
    %217 = vmatpush1.bf16.msra.mxu0 0
    %218 = vmatprep.subr.bf16.mxu0 %v204
    %219 = vmatpush1.bf16.msra.mxu0 %v201
    %220 = vmatprep.subr.bf16.mxu0 %v186
    %221 = vmatpush1.bf16.msra.mxu0 %v185
    %222 = vmatprep.subr.bf16.mxu0 0
    %223 = vmatpush2.bf16.msra.mxu0 0
    %224 = vmatprep.subr.bf16.mxu0 0
    %225 = vmatpush2.bf16.msra.mxu0 0
    %226 = vmatprep.subr.bf16.mxu0 0
    %227 = vmatpush2.bf16.msra.mxu0 0
    %228 = vmatprep.subr.bf16.mxu0 0
    %229 = vmatpush2.bf16.msra.mxu0 0
    %230 = vmatprep.subr.bf16.mxu0 0
    %231 = vmatpush2.bf16.msra.mxu0 0
    %232 = vmatprep.subr.bf16.mxu0 0
    %233 = vmatpush2.bf16.msra.mxu0 0
    %234 = vmatprep.subr.bf16.mxu0 0
    %235 = vmatpush2.bf16.msra.mxu0 0
    %236 = vmatprep.subr.bf16.mxu0 0
    %237 = vmatpush2.bf16.msra.mxu0 0
    %238 = vmatprep.mubr.bf16.mxu0 0
    %239 = vmatmul.mubr.bf16.gmra.mxu0 %v192
    %v240 = vpop.f32.mrf.mxu0
    %v241 = vadd.f32 %v145, %v240
    %v242 = vpop.f32.mrf.mxu0
    %v243 = vadd.f32 %v147, %v242
    %v244 = vpop.f32.mrf.mxu0
    %v245 = vadd.f32 %v149, %v244
    %v246 = vpop.f32.mrf.mxu0
    %v247 = vadd.f32 %v151, %v246
    %248 = vmatprep.mubr.bf16.mxu0 0
    %249 = vmatmul.mubr.bf16.gmra.mxu0 %v195
    %v250 = vpop.f32.mrf.mxu0
    %v251 = vadd.f32 %v155, %v250
    %v252 = vpop.f32.mrf.mxu0
    %v253 = vadd.f32 %v157, %v252
    %v254 = vpop.f32.mrf.mxu0
    %v255 = vadd.f32 %v159, %v254
    %v256 = vpop.f32.mrf.mxu0
    %v257 = vadd.f32 %v161, %v256
    %258 = vmatprep.mubr.bf16.mxu0 0
    %259 = vmatmul.mubr.bf16.gmra.mxu0 %v198
    %v260 = vpop.f32.mrf.mxu0
    %v261 = vadd.f32 %v165, %v260
    %v262 = vpop.f32.mrf.mxu0
    %v263 = vadd.f32 %v167, %v262
    %v264 = vpop.f32.mrf.mxu0
    %v265 = vadd.f32 %v169, %v264
    %v266 = vpop.f32.mrf.mxu0
    %v267 = vadd.f32 %v171, %v266
    %268 = vdwg.mxu0
    %v269 = vld [vmem:[%s0 + $0x2] sm:$0xff]
    %v270 = vld [vmem:[%s0 + $0xa] sm:$0xff]
    %v271 = vld [vmem:[%s0 + $0x12] sm:$0xff]
    %v272 = vld [vmem:[%s0 + $0x22] sm:$0xff]
    %v273 = vld [vmem:[%s0 + $0x2a] sm:$0xff]
    %v274 = vld [vmem:[%s0 + $0x32] sm:$0xff]
    %v275 = vpack.c.bf16 %v270, %v269
    %v276 = vpack.c.bf16 %v272, %v271
    %v277 = vpack.c.bf16 %v274, %v273
    %s278 = scalar_lea.vmem %s1, 64
    %v279 = vld [vmem:[%s278] sm:$0xff]
    %v280 = vld [vmem:[%s278 + $0x8] sm:$0xff]
    %v281 = vld [vmem:[%s278 + $0x10] sm:$0xff]
    %v282 = vld [vmem:[%s278 + $0x18] sm:$0x33]
    %v287 = vunpack.c.l.b16 %v279
    %v288 = vunpack.c.h.b16 %v279
    %v289 = vunpack.c.l.b16 %v280
    %v290 = vunpack.c.h.b16 %v280
    %v291 = vunpack.c.l.b16 %v281
    %v292 = vunpack.c.h.b16 %v281
    %v293 = vunpack.c.l.b16 %v282
    %v294 = vunpack.c.h.b16 %v282
    %v295 = vpack.c.b16 %v289, %v287
    %v296 = vpack.c.b16 %v290, %v288
    %v297 = vpack.c.b16 %v293, %v291
    %v298 = vpack.c.b16 %v294, %v292
    %v302 = vsel %vm93, %v275, 0
    %v305 = vsel %vm93, %v276, 0
    %v308 = vsel %vm93, %v277, 0
    %v311 = vsel %vm103, %v297, 0
    %v314 = vsel %vm103, %v298, 0
    %316 = vmatprep.subr.bf16.mxu0 0
    %317 = vmatpush1.bf16.msra.mxu0 0
    %318 = vmatprep.subr.bf16.mxu0 0
    %319 = vmatpush1.bf16.msra.mxu0 0
    %320 = vmatprep.subr.bf16.mxu0 0
    %321 = vmatpush1.bf16.msra.mxu0 0
    %322 = vmatprep.subr.bf16.mxu0 0
    %323 = vmatpush1.bf16.msra.mxu0 0
    %324 = vmatprep.subr.bf16.mxu0 0
    %325 = vmatpush1.bf16.msra.mxu0 0
    %326 = vmatprep.subr.bf16.mxu0 0
    %327 = vmatpush1.bf16.msra.mxu0 0
    %328 = vmatprep.subr.bf16.mxu0 %v314
    %329 = vmatpush1.bf16.msra.mxu0 %v311
    %330 = vmatprep.subr.bf16.mxu0 %v296
    %331 = vmatpush1.bf16.msra.mxu0 %v295
    %332 = vmatprep.subr.bf16.mxu0 0
    %333 = vmatpush2.bf16.msra.mxu0 0
    %334 = vmatprep.subr.bf16.mxu0 0
    %335 = vmatpush2.bf16.msra.mxu0 0
    %336 = vmatprep.subr.bf16.mxu0 0
    %337 = vmatpush2.bf16.msra.mxu0 0
    %338 = vmatprep.subr.bf16.mxu0 0
    %339 = vmatpush2.bf16.msra.mxu0 0
    %340 = vmatprep.subr.bf16.mxu0 0
    %341 = vmatpush2.bf16.msra.mxu0 0
    %342 = vmatprep.subr.bf16.mxu0 0
    %343 = vmatpush2.bf16.msra.mxu0 0
    %344 = vmatprep.subr.bf16.mxu0 0
    %345 = vmatpush2.bf16.msra.mxu0 0
    %346 = vmatprep.subr.bf16.mxu0 0
    %347 = vmatpush2.bf16.msra.mxu0 0
    %348 = vmatprep.mubr.bf16.mxu0 0
    %349 = vmatmul.mubr.bf16.gmra.mxu0 %v302
    %v350 = vpop.f32.mrf.mxu0
    %v351 = vadd.f32 0.0, %v350
    %v352 = vpop.f32.mrf.mxu0
    %v353 = vadd.f32 0.0, %v352
    %v354 = vpop.f32.mrf.mxu0
    %v355 = vadd.f32 0.0, %v354
    %v356 = vpop.f32.mrf.mxu0
    %v357 = vadd.f32 0.0, %v356
    %358 = vmatprep.mubr.bf16.mxu0 0
    %359 = vmatmul.mubr.bf16.gmra.mxu0 %v305
    %v360 = vpop.f32.mrf.mxu0
    %v361 = vadd.f32 0.0, %v360
    %v362 = vpop.f32.mrf.mxu0
    %v363 = vadd.f32 0.0, %v362
    %v364 = vpop.f32.mrf.mxu0
    %v365 = vadd.f32 0.0, %v364
    %v366 = vpop.f32.mrf.mxu0
    %v367 = vadd.f32 0.0, %v366
    %368 = vmatprep.mubr.bf16.mxu0 0
    %369 = vmatmul.mubr.bf16.gmra.mxu0 %v308
    %v370 = vpop.f32.mrf.mxu0
    %v371 = vadd.f32 0.0, %v370
    %v372 = vpop.f32.mrf.mxu0
    %v373 = vadd.f32 0.0, %v372
    %v374 = vpop.f32.mrf.mxu0
    %v375 = vadd.f32 0.0, %v374
    %v376 = vpop.f32.mrf.mxu0
    %v377 = vadd.f32 0.0, %v376
    %378 = vdwg.mxu0
    %v379 = vadd.f32 %v241, %v351
    %v380 = vadd.f32 %v243, %v353
    %v381 = vadd.f32 %v245, %v355
    %v382 = vadd.f32 %v247, %v357
    %v383 = vadd.f32 %v251, %v361
    %v384 = vadd.f32 %v253, %v363
    %v385 = vadd.f32 %v255, %v365
    %v386 = vadd.f32 %v257, %v367
    %v387 = vadd.f32 %v261, %v371
    %v388 = vadd.f32 %v263, %v373
    %v389 = vadd.f32 %v265, %v375
    %v390 = vadd.f32 %v267, %v377
    %v391 = vld [vmem:[%s0 + $0x3] sm:$0xff]
    %v392 = vld [vmem:[%s0 + $0xb] sm:$0xff]
    %v393 = vld [vmem:[%s0 + $0x13] sm:$0xff]
    %v394 = vld [vmem:[%s0 + $0x23] sm:$0xff]
    %v395 = vld [vmem:[%s0 + $0x2b] sm:$0xff]
    %v396 = vld [vmem:[%s0 + $0x33] sm:$0xff]
    %v397 = vpack.c.bf16 %v392, %v391
    %v398 = vpack.c.bf16 %v394, %v393
    %v399 = vpack.c.bf16 %v396, %v395
    %s400 = scalar_lea.vmem %s1, 96
    %v401 = vld [vmem:[%s400] sm:$0xff]
    %v402 = vld [vmem:[%s400 + $0x8] sm:$0xff]
    %v403 = vld [vmem:[%s400 + $0x10] sm:$0xff]
    %v404 = vld [vmem:[%s400 + $0x18] sm:$0x33]
    %v409 = vunpack.c.l.b16 %v401
    %v410 = vunpack.c.h.b16 %v401
    %v411 = vunpack.c.l.b16 %v402
    %v412 = vunpack.c.h.b16 %v402
    %v413 = vunpack.c.l.b16 %v403
    %v414 = vunpack.c.h.b16 %v403
    %v415 = vunpack.c.l.b16 %v404
    %v416 = vunpack.c.h.b16 %v404
    %v417 = vpack.c.b16 %v411, %v409
    %v418 = vpack.c.b16 %v412, %v410
    %v419 = vpack.c.b16 %v415, %v413
    %v420 = vpack.c.b16 %v416, %v414
    %v424 = vsel %vm93, %v397, 0
    %v427 = vsel %vm93, %v398, 0
    %v430 = vsel %vm93, %v399, 0
    %v433 = vsel %vm103, %v419, 0
    %v436 = vsel %vm103, %v420, 0
    %438 = vmatprep.subr.bf16.mxu0 0
    %439 = vmatpush1.bf16.msra.mxu0 0
    %440 = vmatprep.subr.bf16.mxu0 0
    %441 = vmatpush1.bf16.msra.mxu0 0
    %442 = vmatprep.subr.bf16.mxu0 0
    %443 = vmatpush1.bf16.msra.mxu0 0
    %444 = vmatprep.subr.bf16.mxu0 0
    %445 = vmatpush1.bf16.msra.mxu0 0
    %446 = vmatprep.subr.bf16.mxu0 0
    %447 = vmatpush1.bf16.msra.mxu0 0
    %448 = vmatprep.subr.bf16.mxu0 0
    %449 = vmatpush1.bf16.msra.mxu0 0
    %450 = vmatprep.subr.bf16.mxu0 %v436
    %451 = vmatpush1.bf16.msra.mxu0 %v433
    %452 = vmatprep.subr.bf16.mxu0 %v418
    %453 = vmatpush1.bf16.msra.mxu0 %v417
    %454 = vmatprep.subr.bf16.mxu0 0
    %455 = vmatpush2.bf16.msra.mxu0 0
    %456 = vmatprep.subr.bf16.mxu0 0
    %457 = vmatpush2.bf16.msra.mxu0 0
    %458 = vmatprep.subr.bf16.mxu0 0
    %459 = vmatpush2.bf16.msra.mxu0 0
    %460 = vmatprep.subr.bf16.mxu0 0
    %461 = vmatpush2.bf16.msra.mxu0 0
    %462 = vmatprep.subr.bf16.mxu0 0
    %463 = vmatpush2.bf16.msra.mxu0 0
    %464 = vmatprep.subr.bf16.mxu0 0
    %465 = vmatpush2.bf16.msra.mxu0 0
    %466 = vmatprep.subr.bf16.mxu0 0
    %467 = vmatpush2.bf16.msra.mxu0 0
    %468 = vmatprep.subr.bf16.mxu0 0
    %469 = vmatpush2.bf16.msra.mxu0 0
    %470 = vmatprep.mubr.bf16.mxu0 0
    %471 = vmatmul.mubr.bf16.gmra.mxu0 %v424
    %v472 = vpop.f32.mrf.mxu0
    %v473 = vadd.f32 0.0, %v472
    %v474 = vpop.f32.mrf.mxu0
    %v475 = vadd.f32 0.0, %v474
    %v476 = vpop.f32.mrf.mxu0
    %v477 = vadd.f32 0.0, %v476
    %v478 = vpop.f32.mrf.mxu0
    %v479 = vadd.f32 0.0, %v478
    %480 = vmatprep.mubr.bf16.mxu0 0
    %481 = vmatmul.mubr.bf16.gmra.mxu0 %v427
    %v482 = vpop.f32.mrf.mxu0
    %v483 = vadd.f32 0.0, %v482
    %v484 = vpop.f32.mrf.mxu0
    %v485 = vadd.f32 0.0, %v484
    %v486 = vpop.f32.mrf.mxu0
    %v487 = vadd.f32 0.0, %v486
    %v488 = vpop.f32.mrf.mxu0
    %v489 = vadd.f32 0.0, %v488
    %490 = vmatprep.mubr.bf16.mxu0 0
    %491 = vmatmul.mubr.bf16.gmra.mxu0 %v430
    %v492 = vpop.f32.mrf.mxu0
    %v493 = vadd.f32 0.0, %v492
    %v494 = vpop.f32.mrf.mxu0
    %v495 = vadd.f32 0.0, %v494
    %v496 = vpop.f32.mrf.mxu0
    %v497 = vadd.f32 0.0, %v496
    %v498 = vpop.f32.mrf.mxu0
    %v499 = vadd.f32 0.0, %v498
    %500 = vdwg.mxu0
    %v501 = vadd.f32 %v379, %v473
    %v502 = vadd.f32 %v380, %v475
    %v503 = vadd.f32 %v381, %v477
    %v504 = vadd.f32 %v382, %v479
    %v505 = vadd.f32 %v383, %v483
    %v506 = vadd.f32 %v384, %v485
    %v507 = vadd.f32 %v385, %v487
    %v508 = vadd.f32 %v386, %v489
    %v509 = vadd.f32 %v387, %v493
    %v510 = vadd.f32 %v388, %v495
    %v511 = vadd.f32 %v389, %v497
    %v512 = vadd.f32 %v390, %v499
    %v513 = vld [vmem:[%s0 + $0x4] sm:$0xff]
    %v514 = vld [vmem:[%s0 + $0xc] sm:$0xff]
    %v515 = vld [vmem:[%s0 + $0x14] sm:$0xff]
    %v516 = vld [vmem:[%s0 + $0x24] sm:$0xff]
    %v517 = vld [vmem:[%s0 + $0x2c] sm:$0xff]
    %v518 = vld [vmem:[%s0 + $0x34] sm:$0xff]
    %v519 = vpack.c.bf16 %v514, %v513
    %v520 = vpack.c.bf16 %v516, %v515
    %v521 = vpack.c.bf16 %v518, %v517
    %s522 = scalar_lea.vmem %s1, 128
    %v523 = vld [vmem:[%s522] sm:$0xff]
    %v524 = vld [vmem:[%s522 + $0x8] sm:$0xff]
    %v525 = vld [vmem:[%s522 + $0x10] sm:$0xff]
    %v526 = vld [vmem:[%s522 + $0x18] sm:$0x33]
    %v531 = vunpack.c.l.b16 %v523
    %v532 = vunpack.c.h.b16 %v523
    %v533 = vunpack.c.l.b16 %v524
    %v534 = vunpack.c.h.b16 %v524
    %v535 = vunpack.c.l.b16 %v525
    %v536 = vunpack.c.h.b16 %v525
    %v537 = vunpack.c.l.b16 %v526
    %v538 = vunpack.c.h.b16 %v526
    %v539 = vpack.c.b16 %v533, %v531
    %v540 = vpack.c.b16 %v534, %v532
    %v541 = vpack.c.b16 %v537, %v535
    %v542 = vpack.c.b16 %v538, %v536
    %v546 = vsel %vm93, %v519, 0
    %v549 = vsel %vm93, %v520, 0
    %v552 = vsel %vm93, %v521, 0
    %v555 = vsel %vm103, %v541, 0
    %v558 = vsel %vm103, %v542, 0
    %560 = vmatprep.subr.bf16.mxu0 0
    %561 = vmatpush1.bf16.msra.mxu0 0
    %562 = vmatprep.subr.bf16.mxu0 0
    %563 = vmatpush1.bf16.msra.mxu0 0
    %564 = vmatprep.subr.bf16.mxu0 0
    %565 = vmatpush1.bf16.msra.mxu0 0
    %566 = vmatprep.subr.bf16.mxu0 0
    %567 = vmatpush1.bf16.msra.mxu0 0
    %568 = vmatprep.subr.bf16.mxu0 0
    %569 = vmatpush1.bf16.msra.mxu0 0
    %570 = vmatprep.subr.bf16.mxu0 0
    %571 = vmatpush1.bf16.msra.mxu0 0
    %572 = vmatprep.subr.bf16.mxu0 %v558
    %573 = vmatpush1.bf16.msra.mxu0 %v555
    %574 = vmatprep.subr.bf16.mxu0 %v540
    %575 = vmatpush1.bf16.msra.mxu0 %v539
    %576 = vmatprep.subr.bf16.mxu0 0
    %577 = vmatpush2.bf16.msra.mxu0 0
    %578 = vmatprep.subr.bf16.mxu0 0
    %579 = vmatpush2.bf16.msra.mxu0 0
    %580 = vmatprep.subr.bf16.mxu0 0
    %581 = vmatpush2.bf16.msra.mxu0 0
    %582 = vmatprep.subr.bf16.mxu0 0
    %583 = vmatpush2.bf16.msra.mxu0 0
    %584 = vmatprep.subr.bf16.mxu0 0
    %585 = vmatpush2.bf16.msra.mxu0 0
    %586 = vmatprep.subr.bf16.mxu0 0
    %587 = vmatpush2.bf16.msra.mxu0 0
    %588 = vmatprep.subr.bf16.mxu0 0
    %589 = vmatpush2.bf16.msra.mxu0 0
    %590 = vmatprep.subr.bf16.mxu0 0
    %591 = vmatpush2.bf16.msra.mxu0 0
    %592 = vmatprep.mubr.bf16.mxu0 0
    %593 = vmatmul.mubr.bf16.gmra.mxu0 %v546
    %v594 = vpop.f32.mrf.mxu0
    %v595 = vadd.f32 0.0, %v594
    %v596 = vpop.f32.mrf.mxu0
    %v597 = vadd.f32 0.0, %v596
    %v598 = vpop.f32.mrf.mxu0
    %v599 = vadd.f32 0.0, %v598
    %v600 = vpop.f32.mrf.mxu0
    %v601 = vadd.f32 0.0, %v600
    %602 = vmatprep.mubr.bf16.mxu0 0
    %603 = vmatmul.mubr.bf16.gmra.mxu0 %v549
    %v604 = vpop.f32.mrf.mxu0
    %v605 = vadd.f32 0.0, %v604
    %v606 = vpop.f32.mrf.mxu0
    %v607 = vadd.f32 0.0, %v606
    %v608 = vpop.f32.mrf.mxu0
    %v609 = vadd.f32 0.0, %v608
    %v610 = vpop.f32.mrf.mxu0
    %v611 = vadd.f32 0.0, %v610
    %612 = vmatprep.mubr.bf16.mxu0 0
    %613 = vmatmul.mubr.bf16.gmra.mxu0 %v552
    %v614 = vpop.f32.mrf.mxu0
    %v615 = vadd.f32 0.0, %v614
    %v616 = vpop.f32.mrf.mxu0
    %v617 = vadd.f32 0.0, %v616
    %v618 = vpop.f32.mrf.mxu0
    %v619 = vadd.f32 0.0, %v618
    %v620 = vpop.f32.mrf.mxu0
    %v621 = vadd.f32 0.0, %v620
    %622 = vdwg.mxu0
    %v623 = vadd.f32 %v501, %v595
    %v624 = vadd.f32 %v502, %v597
    %v625 = vadd.f32 %v503, %v599
    %v626 = vadd.f32 %v504, %v601
    %v627 = vadd.f32 %v505, %v605
    %v628 = vadd.f32 %v506, %v607
    %v629 = vadd.f32 %v507, %v609
    %v630 = vadd.f32 %v508, %v611
    %v631 = vadd.f32 %v509, %v615
    %v632 = vadd.f32 %v510, %v617
    %v633 = vadd.f32 %v511, %v619
    %v634 = vadd.f32 %v512, %v621
    %v635 = vld [vmem:[%s2] sm:$0x3]
    %v637 = vlaneseq
    %v638 = vshrl.u32 %v637, 7
    %v639 = vsub.s32 0, %v638
    %v640 = vrot.slane %v635, %v639
    %v641 = vlaneseq
    %v642 = vshrl.u32 %v641, 7
    %v643 = vsub.s32 1, %v642
    %v644 = vrot.slane %v635, %v643
    %v647 = vadd.f32 %v623, %v640
    %v648 = vadd.f32 %v624, %v644
    %v649 = vadd.f32 %v625, %v640
    %v650 = vadd.f32 %v626, %v644
    %v651 = vadd.f32 %v627, %v640
    %v652 = vadd.f32 %v628, %v644
    %v653 = vadd.f32 %v629, %v640
    %v654 = vadd.f32 %v630, %v644
    %v655 = vadd.f32 %v631, %v640
    %v656 = vadd.f32 %v632, %v644
    %v657 = vadd.f32 %v633, %v640
    %v658 = vadd.f32 %v634, %v644
    %v659 = vmax.f32 %v647, %v648
    %v660 = vmax.f32 %v649, %v650
    %v661 = vmax.f32 %v651, %v652
    %v662 = vmax.f32 %v653, %v654
    %v663 = vmax.f32 %v655, %v656
    %v664 = vmax.f32 %v657, %v658
    %665 = vst [vmem:[#allocation2] sm:$0xff] %v659
    %666 = vst [vmem:[#allocation2 + $0x8] sm:$0xff] %v660
    %667 = vst [vmem:[#allocation2 + $0x10] sm:$0xff] %v661
    %668 = vst [vmem:[#allocation2 + $0x18] sm:$0xff] %v662
    %669 = vst [vmem:[#allocation2 + $0x20] sm:$0xff] %v663
    %670 = vst [vmem:[#allocation2 + $0x28] sm:$0xff] %v664
    %v671 = vld [vmem:[#allocation2] ss:$2 sm:$0xff]
    %s672 = scalar_lea.vmem [#allocation2], 16
    %v673 = vld [vmem:[%s672] ss:$2 sm:$0xf]
    %s674 = scalar_lea.vmem [#allocation2], 24
    %v675 = vld [vmem:[%s674] ss:$2 sm:$0xff]
    %s676 = scalar_lea.vmem [#allocation2], 40
    %v677 = vld [vmem:[%s676] ss:$2 sm:$0xf]
    %s678 = scalar_lea.vmem [#allocation2], 1
    %v679 = vld [vmem:[%s678] ss:$2 sm:$0xff]
    %s680 = scalar_lea.vmem [#allocation2], 17
    %v681 = vld [vmem:[%s680] ss:$2 sm:$0xf]
    %s682 = scalar_lea.vmem [#allocation2], 25
    %v683 = vld [vmem:[%s682] ss:$2 sm:$0xff]
    %s684 = scalar_lea.vmem [#allocation2], 41
    %v685 = vld [vmem:[%s684] ss:$2 sm:$0xf]
    %v686 = vmax.f32 %v671, %v679
    %v687 = vmax.f32 %v673, %v681
    %v688 = vmax.f32 %v675, %v683
    %v689 = vmax.f32 %v677, %v685
    %v690 = vmax.f32 %v686, 0.0
    %v691 = vmax.f32 %v687, 0.0
    %v692 = vmax.f32 %v688, 0.0
    %v693 = vmax.f32 %v689, 0.0
    %694 = vst [vmem:[#allocation3] sm:$0xff] %v690
    %695 = vst [vmem:[#allocation3 + $0x8] sm:$0xf] %v691
    %696 = vst [vmem:[#allocation3 + $0x10] sm:$0xff] %v692
    %697 = vst [vmem:[#allocation3 + $0x18] sm:$0xf] %v693
    %v698 = vld [vmem:[#allocation3] sm:$0xff]
    %v699 = vld [vmem:[#allocation3 + $0x10] sm:$0xff]
    %v700 = vpack.c.bf16 %v699, %v698
    %v701 = vld [vmem:[#allocation5] sm:$0xff]
    %v702 = vld [vmem:[#allocation5 + $0x8] sm:$0xff]
    %v703 = vld [vmem:[#allocation5 + $0x10] sm:$0xff]
    %v704 = vld [vmem:[#allocation5 + $0x18] sm:$0xff]
    %v705 = vld [vmem:[#allocation5 + $0x20] sm:$0xff]
    %v706 = vld [vmem:[#allocation5 + $0x28] sm:$0xff]
    %v707 = vld [vmem:[#allocation5 + $0x30] sm:$0xff]
    %v708 = vld [vmem:[#allocation5 + $0x38] sm:$0xff]
    %v709 = vld [vmem:[#allocation5 + $0x40] sm:$0xff]
    %v710 = vld [vmem:[#allocation5 + $0x48] sm:$0xff]
    %v711 = vld [vmem:[#allocation5 + $0x50] sm:$0xff]
    %v712 = vld [vmem:[#allocation5 + $0x58] sm:$0xff]
    %v713 = vld [vmem:[#allocation5 + $0x60] sm:$0xff]
    %v714 = vld [vmem:[#allocation5 + $0x68] sm:$0xff]
    %v715 = vld [vmem:[#allocation5 + $0x70] sm:$0xff]
    %v716 = vld [vmem:[#allocation5 + $0x78] sm:$0xff]
    %v717 = vld [vmem:[#allocation3 + $0x1] sm:$0xff]
    %v718 = vld [vmem:[#allocation3 + $0x11] sm:$0xff]
    %v719 = vpack.c.bf16 %v718, %v717
    %s720 = scalar_lea.vmem [#allocation5], 128
    %v721 = vld [vmem:[%s720] sm:$0xff]
    %v722 = vld [vmem:[%s720 + $0x8] sm:$0xff]
    %v723 = vld [vmem:[%s720 + $0x10] sm:$0xff]
    %v724 = vld [vmem:[%s720 + $0x18] sm:$0xff]
    %v725 = vld [vmem:[%s720 + $0x20] sm:$0xff]
    %v726 = vld [vmem:[%s720 + $0x28] sm:$0xff]
    %v727 = vld [vmem:[%s720 + $0x30] sm:$0xff]
    %v728 = vld [vmem:[%s720 + $0x38] sm:$0xff]
    %v729 = vld [vmem:[%s720 + $0x40] sm:$0xff]
    %v730 = vld [vmem:[%s720 + $0x48] sm:$0xff]
    %v731 = vld [vmem:[%s720 + $0x50] sm:$0xff]
    %v732 = vld [vmem:[%s720 + $0x58] sm:$0xff]
    %v733 = vld [vmem:[%s720 + $0x60] sm:$0xff]
    %v734 = vld [vmem:[%s720 + $0x68] sm:$0xff]
    %v735 = vld [vmem:[%s720 + $0x70] sm:$0xff]
    %v736 = vld [vmem:[%s720 + $0x78] sm:$0xff]
    %v753 = vunpack.c.l.b16 %v721
    %v754 = vunpack.c.h.b16 %v721
    %v755 = vunpack.c.l.b16 %v722
    %v756 = vunpack.c.h.b16 %v722
    %v757 = vunpack.c.l.b16 %v723
    %v758 = vunpack.c.h.b16 %v723
    %v759 = vunpack.c.l.b16 %v724
    %v760 = vunpack.c.h.b16 %v724
    %v761 = vunpack.c.l.b16 %v725
    %v762 = vunpack.c.h.b16 %v725
    %v763 = vunpack.c.l.b16 %v726
    %v764 = vunpack.c.h.b16 %v726
    %v765 = vunpack.c.l.b16 %v727
    %v766 = vunpack.c.h.b16 %v727
    %v767 = vunpack.c.l.b16 %v728
    %v768 = vunpack.c.h.b16 %v728
    %v769 = vunpack.c.l.b16 %v729
    %v770 = vunpack.c.h.b16 %v729
    %v771 = vunpack.c.l.b16 %v730
    %v772 = vunpack.c.h.b16 %v730
    %v773 = vunpack.c.l.b16 %v731
    %v774 = vunpack.c.h.b16 %v731
    %v775 = vunpack.c.l.b16 %v732
    %v776 = vunpack.c.h.b16 %v732
    %v777 = vunpack.c.l.b16 %v733
    %v778 = vunpack.c.h.b16 %v733
    %v779 = vunpack.c.l.b16 %v734
    %v780 = vunpack.c.h.b16 %v734
    %v781 = vunpack.c.l.b16 %v735
    %v782 = vunpack.c.h.b16 %v735
    %v783 = vunpack.c.l.b16 %v736
    %v784 = vunpack.c.h.b16 %v736
    %v785 = vpack.c.b16 %v755, %v753
    %v786 = vpack.c.b16 %v756, %v754
    %v787 = vpack.c.b16 %v759, %v757
    %v788 = vpack.c.b16 %v760, %v758
    %v789 = vpack.c.b16 %v763, %v761
    %v790 = vpack.c.b16 %v764, %v762
    %v791 = vpack.c.b16 %v767, %v765
    %v792 = vpack.c.b16 %v768, %v766
    %v793 = vpack.c.b16 %v771, %v769
    %v794 = vpack.c.b16 %v772, %v770
    %v795 = vpack.c.b16 %v775, %v773
    %v796 = vpack.c.b16 %v776, %v774
    %v797 = vpack.c.b16 %v779, %v777
    %v798 = vpack.c.b16 %v780, %v778
    %v799 = vpack.c.b16 %v783, %v781
    %v800 = vpack.c.b16 %v784, %v782
    %817 = vmatprep.subr.bf16.mxu0 %v800
    %818 = vmatpush1.bf16.msra.mxu0 %v799
    %819 = vmatprep.subr.bf16.mxu0 %v798
    %820 = vmatpush1.bf16.msra.mxu0 %v797
    %821 = vmatprep.subr.bf16.mxu0 %v796
    %822 = vmatpush1.bf16.msra.mxu0 %v795
    %823 = vmatprep.subr.bf16.mxu0 %v794
    %824 = vmatpush1.bf16.msra.mxu0 %v793
    %825 = vmatprep.subr.bf16.mxu0 %v792
    %826 = vmatpush1.bf16.msra.mxu0 %v791
    %827 = vmatprep.subr.bf16.mxu0 %v790
    %828 = vmatpush1.bf16.msra.mxu0 %v789
    %829 = vmatprep.subr.bf16.mxu0 %v788
    %830 = vmatpush1.bf16.msra.mxu0 %v787
    %831 = vmatprep.subr.bf16.mxu0 %v786
    %832 = vmatpush1.bf16.msra.mxu0 %v785
    %833 = vmatprep.subr.bf16.mxu0 0
    %834 = vmatpush2.bf16.msra.mxu0 0
    %835 = vmatprep.subr.bf16.mxu0 0
    %836 = vmatpush2.bf16.msra.mxu0 0
    %837 = vmatprep.subr.bf16.mxu0 0
    %838 = vmatpush2.bf16.msra.mxu0 0
    %839 = vmatprep.subr.bf16.mxu0 0
    %840 = vmatpush2.bf16.msra.mxu0 0
    %841 = vmatprep.subr.bf16.mxu0 0
    %842 = vmatpush2.bf16.msra.mxu0 0
    %843 = vmatprep.subr.bf16.mxu0 0
    %844 = vmatpush2.bf16.msra.mxu0 0
    %845 = vmatprep.subr.bf16.mxu0 0
    %846 = vmatpush2.bf16.msra.mxu0 0
    %847 = vmatprep.subr.bf16.mxu0 0
    %848 = vmatpush2.bf16.msra.mxu0 0
    %849 = vmatprep.mubr.bf16.mxu0 0
    %850 = vmatmul.mubr.bf16.gmra.mxu0 %v719
    %v851 = vpop.f32.mrf.mxu0
    %v852 = vadd.f32 0.0, %v851
    %v853 = vpop.f32.mrf.mxu0
    %v854 = vadd.f32 0.0, %v853
    %v855 = vpop.f32.mrf.mxu0
    %v856 = vadd.f32 0.0, %v855
    %v857 = vpop.f32.mrf.mxu0
    %v858 = vadd.f32 0.0, %v857
    %859 = vdwg.mxu0
    %v876 = vunpack.c.l.b16 %v701
    %v877 = vunpack.c.h.b16 %v701
    %v878 = vunpack.c.l.b16 %v702
    %v879 = vunpack.c.h.b16 %v702
    %v880 = vunpack.c.l.b16 %v703
    %v881 = vunpack.c.h.b16 %v703
    %v882 = vunpack.c.l.b16 %v704
    %v883 = vunpack.c.h.b16 %v704
    %v884 = vunpack.c.l.b16 %v705
    %v885 = vunpack.c.h.b16 %v705
    %v886 = vunpack.c.l.b16 %v706
    %v887 = vunpack.c.h.b16 %v706
    %v888 = vunpack.c.l.b16 %v707
    %v889 = vunpack.c.h.b16 %v707
    %v890 = vunpack.c.l.b16 %v708
    %v891 = vunpack.c.h.b16 %v708
    %v892 = vunpack.c.l.b16 %v709
    %v893 = vunpack.c.h.b16 %v709
    %v894 = vunpack.c.l.b16 %v710
    %v895 = vunpack.c.h.b16 %v710
    %v896 = vunpack.c.l.b16 %v711
    %v897 = vunpack.c.h.b16 %v711
    %v898 = vunpack.c.l.b16 %v712
    %v899 = vunpack.c.h.b16 %v712
    %v900 = vunpack.c.l.b16 %v713
    %v901 = vunpack.c.h.b16 %v713
    %v902 = vunpack.c.l.b16 %v714
    %v903 = vunpack.c.h.b16 %v714
    %v904 = vunpack.c.l.b16 %v715
    %v905 = vunpack.c.h.b16 %v715
    %v906 = vunpack.c.l.b16 %v716
    %v907 = vunpack.c.h.b16 %v716
    %v908 = vpack.c.b16 %v878, %v876
    %v909 = vpack.c.b16 %v879, %v877
    %v910 = vpack.c.b16 %v882, %v880
    %v911 = vpack.c.b16 %v883, %v881
    %v912 = vpack.c.b16 %v886, %v884
    %v913 = vpack.c.b16 %v887, %v885
    %v914 = vpack.c.b16 %v890, %v888
    %v915 = vpack.c.b16 %v891, %v889
    %v916 = vpack.c.b16 %v894, %v892
    %v917 = vpack.c.b16 %v895, %v893
    %v918 = vpack.c.b16 %v898, %v896
    %v919 = vpack.c.b16 %v899, %v897
    %v920 = vpack.c.b16 %v902, %v900
    %v921 = vpack.c.b16 %v903, %v901
    %v922 = vpack.c.b16 %v906, %v904
    %v923 = vpack.c.b16 %v907, %v905
    %940 = vmatprep.subr.bf16.mxu0 %v923
    %941 = vmatpush1.bf16.msra.mxu0 %v922
    %942 = vmatprep.subr.bf16.mxu0 %v921
    %943 = vmatpush1.bf16.msra.mxu0 %v920
    %944 = vmatprep.subr.bf16.mxu0 %v919
    %945 = vmatpush1.bf16.msra.mxu0 %v918
    %946 = vmatprep.subr.bf16.mxu0 %v917
    %947 = vmatpush1.bf16.msra.mxu0 %v916
    %948 = vmatprep.subr.bf16.mxu0 %v915
    %949 = vmatpush1.bf16.msra.mxu0 %v914
    %950 = vmatprep.subr.bf16.mxu0 %v913
    %951 = vmatpush1.bf16.msra.mxu0 %v912
    %952 = vmatprep.subr.bf16.mxu0 %v911
    %953 = vmatpush1.bf16.msra.mxu0 %v910
    %954 = vmatprep.subr.bf16.mxu0 %v909
    %955 = vmatpush1.bf16.msra.mxu0 %v908
    %956 = vmatprep.subr.bf16.mxu0 0
    %957 = vmatpush2.bf16.msra.mxu0 0
    %958 = vmatprep.subr.bf16.mxu0 0
    %959 = vmatpush2.bf16.msra.mxu0 0
    %960 = vmatprep.subr.bf16.mxu0 0
    %961 = vmatpush2.bf16.msra.mxu0 0
    %962 = vmatprep.subr.bf16.mxu0 0
    %963 = vmatpush2.bf16.msra.mxu0 0
    %964 = vmatprep.subr.bf16.mxu0 0
    %965 = vmatpush2.bf16.msra.mxu0 0
    %966 = vmatprep.subr.bf16.mxu0 0
    %967 = vmatpush2.bf16.msra.mxu0 0
    %968 = vmatprep.subr.bf16.mxu0 0
    %969 = vmatpush2.bf16.msra.mxu0 0
    %970 = vmatprep.subr.bf16.mxu0 0
    %971 = vmatpush2.bf16.msra.mxu0 0
    %972 = vmatprep.mubr.bf16.mxu0 0
    %973 = vmatmul.mubr.bf16.gmra.mxu0 %v700
    %v974 = vpop.f32.mrf.mxu0
    %v975 = vadd.f32 %v852, %v974
    %v976 = vpop.f32.mrf.mxu0
    %v977 = vadd.f32 %v854, %v976
    %v978 = vpop.f32.mrf.mxu0
    %v979 = vadd.f32 %v856, %v978
    %v980 = vpop.f32.mrf.mxu0
    %v981 = vadd.f32 %v858, %v980
    %982 = vdwg.mxu0
    %v983 = vld [vmem:[#allocation3 + $0x2] sm:$0xff]
    %v984 = vld [vmem:[#allocation3 + $0x12] sm:$0xff]
    %v985 = vpack.c.bf16 %v984, %v983
    %s986 = scalar_lea.vmem [#allocation5], 256
    %v987 = vld [vmem:[%s986] sm:$0xff]
    %v988 = vld [vmem:[%s986 + $0x8] sm:$0xff]
    %v989 = vld [vmem:[%s986 + $0x10] sm:$0xff]
    %v990 = vld [vmem:[%s986 + $0x18] sm:$0xff]
    %v991 = vld [vmem:[%s986 + $0x20] sm:$0xff]
    %v992 = vld [vmem:[%s986 + $0x28] sm:$0xff]
    %v993 = vld [vmem:[%s986 + $0x30] sm:$0xff]
    %v994 = vld [vmem:[%s986 + $0x38] sm:$0xff]
    %v995 = vld [vmem:[%s986 + $0x40] sm:$0xff]
    %v996 = vld [vmem:[%s986 + $0x48] sm:$0xff]
    %v997 = vld [vmem:[%s986 + $0x50] sm:$0xff]
    %v998 = vld [vmem:[%s986 + $0x58] sm:$0xff]
    %v999 = vld [vmem:[%s986 + $0x60] sm:$0xff]
    %v1000 = vld [vmem:[%s986 + $0x68] sm:$0xff]
    %v1001 = vld [vmem:[%s986 + $0x70] sm:$0xff]
    %v1002 = vld [vmem:[%s986 + $0x78] sm:$0xff]
    %v1019 = vunpack.c.l.b16 %v987
    %v1020 = vunpack.c.h.b16 %v987
    %v1021 = vunpack.c.l.b16 %v988
    %v1022 = vunpack.c.h.b16 %v988
    %v1023 = vunpack.c.l.b16 %v989
    %v1024 = vunpack.c.h.b16 %v989
    %v1025 = vunpack.c.l.b16 %v990
    %v1026 = vunpack.c.h.b16 %v990
    %v1027 = vunpack.c.l.b16 %v991
    %v1028 = vunpack.c.h.b16 %v991
    %v1029 = vunpack.c.l.b16 %v992
    %v1030 = vunpack.c.h.b16 %v992
    %v1031 = vunpack.c.l.b16 %v993
    %v1032 = vunpack.c.h.b16 %v993
    %v1033 = vunpack.c.l.b16 %v994
    %v1034 = vunpack.c.h.b16 %v994
    %v1035 = vunpack.c.l.b16 %v995
    %v1036 = vunpack.c.h.b16 %v995
    %v1037 = vunpack.c.l.b16 %v996
    %v1038 = vunpack.c.h.b16 %v996
    %v1039 = vunpack.c.l.b16 %v997
    %v1040 = vunpack.c.h.b16 %v997
    %v1041 = vunpack.c.l.b16 %v998
    %v1042 = vunpack.c.h.b16 %v998
    %v1043 = vunpack.c.l.b16 %v999
    %v1044 = vunpack.c.h.b16 %v999
    %v1045 = vunpack.c.l.b16 %v1000
    %v1046 = vunpack.c.h.b16 %v1000
    %v1047 = vunpack.c.l.b16 %v1001
    %v1048 = vunpack.c.h.b16 %v1001
    %v1049 = vunpack.c.l.b16 %v1002
    %v1050 = vunpack.c.h.b16 %v1002
    %v1051 = vpack.c.b16 %v1021, %v1019
    %v1052 = vpack.c.b16 %v1022, %v1020
    %v1053 = vpack.c.b16 %v1025, %v1023
    %v1054 = vpack.c.b16 %v1026, %v1024
    %v1055 = vpack.c.b16 %v1029, %v1027
    %v1056 = vpack.c.b16 %v1030, %v1028
    %v1057 = vpack.c.b16 %v1033, %v1031
    %v1058 = vpack.c.b16 %v1034, %v1032
    %v1059 = vpack.c.b16 %v1037, %v1035
    %v1060 = vpack.c.b16 %v1038, %v1036
    %v1061 = vpack.c.b16 %v1041, %v1039
    %v1062 = vpack.c.b16 %v1042, %v1040
    %v1063 = vpack.c.b16 %v1045, %v1043
    %v1064 = vpack.c.b16 %v1046, %v1044
    %v1065 = vpack.c.b16 %v1049, %v1047
    %v1066 = vpack.c.b16 %v1050, %v1048
    %1083 = vmatprep.subr.bf16.mxu0 %v1066
    %1084 = vmatpush1.bf16.msra.mxu0 %v1065
    %1085 = vmatprep.subr.bf16.mxu0 %v1064
    %1086 = vmatpush1.bf16.msra.mxu0 %v1063
    %1087 = vmatprep.subr.bf16.mxu0 %v1062
    %1088 = vmatpush1.bf16.msra.mxu0 %v1061
    %1089 = vmatprep.subr.bf16.mxu0 %v1060
    %1090 = vmatpush1.bf16.msra.mxu0 %v1059
    %1091 = vmatprep.subr.bf16.mxu0 %v1058
    %1092 = vmatpush1.bf16.msra.mxu0 %v1057
    %1093 = vmatprep.subr.bf16.mxu0 %v1056
    %1094 = vmatpush1.bf16.msra.mxu0 %v1055
    %1095 = vmatprep.subr.bf16.mxu0 %v1054
    %1096 = vmatpush1.bf16.msra.mxu0 %v1053
    %1097 = vmatprep.subr.bf16.mxu0 %v1052
    %1098 = vmatpush1.bf16.msra.mxu0 %v1051
    %1099 = vmatprep.subr.bf16.mxu0 0
    %1100 = vmatpush2.bf16.msra.mxu0 0
    %1101 = vmatprep.subr.bf16.mxu0 0
    %1102 = vmatpush2.bf16.msra.mxu0 0
    %1103 = vmatprep.subr.bf16.mxu0 0
    %1104 = vmatpush2.bf16.msra.mxu0 0
    %1105 = vmatprep.subr.bf16.mxu0 0
    %1106 = vmatpush2.bf16.msra.mxu0 0
    %1107 = vmatprep.subr.bf16.mxu0 0
    %1108 = vmatpush2.bf16.msra.mxu0 0
    %1109 = vmatprep.subr.bf16.mxu0 0
    %1110 = vmatpush2.bf16.msra.mxu0 0
    %1111 = vmatprep.subr.bf16.mxu0 0
    %1112 = vmatpush2.bf16.msra.mxu0 0
    %1113 = vmatprep.subr.bf16.mxu0 0
    %1114 = vmatpush2.bf16.msra.mxu0 0
    %1115 = vmatprep.mubr.bf16.mxu0 0
    %1116 = vmatmul.mubr.bf16.gmra.mxu0 %v985
    %v1117 = vpop.f32.mrf.mxu0
    %v1118 = vadd.f32 0.0, %v1117
    %v1119 = vpop.f32.mrf.mxu0
    %v1120 = vadd.f32 0.0, %v1119
    %v1121 = vpop.f32.mrf.mxu0
    %v1122 = vadd.f32 0.0, %v1121
    %v1123 = vpop.f32.mrf.mxu0
    %v1124 = vadd.f32 0.0, %v1123
    %1125 = vdwg.mxu0
    %v1126 = vadd.f32 %v975, %v1118
    %v1127 = vadd.f32 %v977, %v1120
    %v1128 = vadd.f32 %v979, %v1122
    %v1129 = vadd.f32 %v981, %v1124
    %v1130 = vld [vmem:[#allocation3 + $0x3] sm:$0xff]
    %v1131 = vld [vmem:[#allocation3 + $0x13] sm:$0xff]
    %v1132 = vpack.c.bf16 %v1131, %v1130
    %s1133 = scalar_lea.vmem [#allocation5], 384
    %v1134 = vld [vmem:[%s1133] sm:$0xff]
    %v1135 = vld [vmem:[%s1133 + $0x8] sm:$0xff]
    %v1136 = vld [vmem:[%s1133 + $0x10] sm:$0xff]
    %v1137 = vld [vmem:[%s1133 + $0x18] sm:$0xff]
    %v1138 = vld [vmem:[%s1133 + $0x20] sm:$0xff]
    %v1139 = vld [vmem:[%s1133 + $0x28] sm:$0xff]
    %v1140 = vld [vmem:[%s1133 + $0x30] sm:$0xff]
    %v1141 = vld [vmem:[%s1133 + $0x38] sm:$0xff]
    %v1142 = vld [vmem:[%s1133 + $0x40] sm:$0xff]
    %v1143 = vld [vmem:[%s1133 + $0x48] sm:$0xff]
    %v1144 = vld [vmem:[%s1133 + $0x50] sm:$0xff]
    %v1145 = vld [vmem:[%s1133 + $0x58] sm:$0xff]
    %v1146 = vld [vmem:[%s1133 + $0x60] sm:$0xff]
    %v1147 = vld [vmem:[%s1133 + $0x68] sm:$0xff]
    %v1148 = vld [vmem:[%s1133 + $0x70] sm:$0xff]
    %v1149 = vld [vmem:[%s1133 + $0x78] sm:$0xff]
    %v1166 = vunpack.c.l.b16 %v1134
    %v1167 = vunpack.c.h.b16 %v1134
    %v1168 = vunpack.c.l.b16 %v1135
    %v1169 = vunpack.c.h.b16 %v1135
    %v1170 = vunpack.c.l.b16 %v1136
    %v1171 = vunpack.c.h.b16 %v1136
    %v1172 = vunpack.c.l.b16 %v1137
    %v1173 = vunpack.c.h.b16 %v1137
    %v1174 = vunpack.c.l.b16 %v1138
    %v1175 = vunpack.c.h.b16 %v1138
    %v1176 = vunpack.c.l.b16 %v1139
    %v1177 = vunpack.c.h.b16 %v1139
    %v1178 = vunpack.c.l.b16 %v1140
    %v1179 = vunpack.c.h.b16 %v1140
    %v1180 = vunpack.c.l.b16 %v1141
    %v1181 = vunpack.c.h.b16 %v1141
    %v1182 = vunpack.c.l.b16 %v1142
    %v1183 = vunpack.c.h.b16 %v1142
    %v1184 = vunpack.c.l.b16 %v1143
    %v1185 = vunpack.c.h.b16 %v1143
    %v1186 = vunpack.c.l.b16 %v1144
    %v1187 = vunpack.c.h.b16 %v1144
    %v1188 = vunpack.c.l.b16 %v1145
    %v1189 = vunpack.c.h.b16 %v1145
    %v1190 = vunpack.c.l.b16 %v1146
    %v1191 = vunpack.c.h.b16 %v1146
    %v1192 = vunpack.c.l.b16 %v1147
    %v1193 = vunpack.c.h.b16 %v1147
    %v1194 = vunpack.c.l.b16 %v1148
    %v1195 = vunpack.c.h.b16 %v1148
    %v1196 = vunpack.c.l.b16 %v1149
    %v1197 = vunpack.c.h.b16 %v1149
    %v1198 = vpack.c.b16 %v1168, %v1166
    %v1199 = vpack.c.b16 %v1169, %v1167
    %v1200 = vpack.c.b16 %v1172, %v1170
    %v1201 = vpack.c.b16 %v1173, %v1171
    %v1202 = vpack.c.b16 %v1176, %v1174
    %v1203 = vpack.c.b16 %v1177, %v1175
    %v1204 = vpack.c.b16 %v1180, %v1178
    %v1205 = vpack.c.b16 %v1181, %v1179
    %v1206 = vpack.c.b16 %v1184, %v1182
    %v1207 = vpack.c.b16 %v1185, %v1183
    %v1208 = vpack.c.b16 %v1188, %v1186
    %v1209 = vpack.c.b16 %v1189, %v1187
    %v1210 = vpack.c.b16 %v1192, %v1190
    %v1211 = vpack.c.b16 %v1193, %v1191
    %v1212 = vpack.c.b16 %v1196, %v1194
    %v1213 = vpack.c.b16 %v1197, %v1195
    %1230 = vmatprep.subr.bf16.mxu0 %v1213
    %1231 = vmatpush1.bf16.msra.mxu0 %v1212
    %1232 = vmatprep.subr.bf16.mxu0 %v1211
    %1233 = vmatpush1.bf16.msra.mxu0 %v1210
    %1234 = vmatprep.subr.bf16.mxu0 %v1209
    %1235 = vmatpush1.bf16.msra.mxu0 %v1208
    %1236 = vmatprep.subr.bf16.mxu0 %v1207
    %1237 = vmatpush1.bf16.msra.mxu0 %v1206
    %1238 = vmatprep.subr.bf16.mxu0 %v1205
    %1239 = vmatpush1.bf16.msra.mxu0 %v1204
    %1240 = vmatprep.subr.bf16.mxu0 %v1203
    %1241 = vmatpush1.bf16.msra.mxu0 %v1202
    %1242 = vmatprep.subr.bf16.mxu0 %v1201
    %1243 = vmatpush1.bf16.msra.mxu0 %v1200
    %1244 = vmatprep.subr.bf16.mxu0 %v1199
    %1245 = vmatpush1.bf16.msra.mxu0 %v1198
    %1246 = vmatprep.subr.bf16.mxu0 0
    %1247 = vmatpush2.bf16.msra.mxu0 0
    %1248 = vmatprep.subr.bf16.mxu0 0
    %1249 = vmatpush2.bf16.msra.mxu0 0
    %1250 = vmatprep.subr.bf16.mxu0 0
    %1251 = vmatpush2.bf16.msra.mxu0 0
    %1252 = vmatprep.subr.bf16.mxu0 0
    %1253 = vmatpush2.bf16.msra.mxu0 0
    %1254 = vmatprep.subr.bf16.mxu0 0
    %1255 = vmatpush2.bf16.msra.mxu0 0
    %1256 = vmatprep.subr.bf16.mxu0 0
    %1257 = vmatpush2.bf16.msra.mxu0 0
    %1258 = vmatprep.subr.bf16.mxu0 0
    %1259 = vmatpush2.bf16.msra.mxu0 0
    %1260 = vmatprep.subr.bf16.mxu0 0
    %1261 = vmatpush2.bf16.msra.mxu0 0
    %1262 = vmatprep.mubr.bf16.mxu0 0
    %1263 = vmatmul.mubr.bf16.gmra.mxu0 %v1132
    %v1264 = vpop.f32.mrf.mxu0
    %v1265 = vadd.f32 0.0, %v1264
    %v1266 = vpop.f32.mrf.mxu0
    %v1267 = vadd.f32 0.0, %v1266
    %v1268 = vpop.f32.mrf.mxu0
    %v1269 = vadd.f32 0.0, %v1268
    %v1270 = vpop.f32.mrf.mxu0
    %v1271 = vadd.f32 0.0, %v1270
    %1272 = vdwg.mxu0
    %v1273 = vadd.f32 %v1126, %v1265
    %v1274 = vadd.f32 %v1127, %v1267
    %v1275 = vadd.f32 %v1128, %v1269
    %v1276 = vadd.f32 %v1129, %v1271
    %v1277 = vld [vmem:[#allocation3 + $0x4] sm:$0xff]
    %v1278 = vld [vmem:[#allocation3 + $0x14] sm:$0xff]
    %v1279 = vpack.c.bf16 %v1278, %v1277
    %s1280 = scalar_lea.vmem [#allocation5], 512
    %v1281 = vld [vmem:[%s1280] sm:$0xff]
    %v1282 = vld [vmem:[%s1280 + $0x8] sm:$0xff]
    %v1283 = vld [vmem:[%s1280 + $0x10] sm:$0xff]
    %v1284 = vld [vmem:[%s1280 + $0x18] sm:$0xff]
    %v1285 = vld [vmem:[%s1280 + $0x20] sm:$0xff]
    %v1286 = vld [vmem:[%s1280 + $0x28] sm:$0xff]
    %v1287 = vld [vmem:[%s1280 + $0x30] sm:$0xff]
    %v1288 = vld [vmem:[%s1280 + $0x38] sm:$0xff]
    %v1289 = vld [vmem:[%s1280 + $0x40] sm:$0xff]
    %v1290 = vld [vmem:[%s1280 + $0x48] sm:$0xff]
    %v1291 = vld [vmem:[%s1280 + $0x50] sm:$0xff]
    %v1292 = vld [vmem:[%s1280 + $0x58] sm:$0xff]
    %v1293 = vld [vmem:[%s1280 + $0x60] sm:$0xff]
    %v1294 = vld [vmem:[%s1280 + $0x68] sm:$0xff]
    %v1295 = vld [vmem:[%s1280 + $0x70] sm:$0xff]
    %v1296 = vld [vmem:[%s1280 + $0x78] sm:$0xff]
    %v1313 = vunpack.c.l.b16 %v1281
    %v1314 = vunpack.c.h.b16 %v1281
    %v1315 = vunpack.c.l.b16 %v1282
    %v1316 = vunpack.c.h.b16 %v1282
    %v1317 = vunpack.c.l.b16 %v1283
    %v1318 = vunpack.c.h.b16 %v1283
    %v1319 = vunpack.c.l.b16 %v1284
    %v1320 = vunpack.c.h.b16 %v1284
    %v1321 = vunpack.c.l.b16 %v1285
    %v1322 = vunpack.c.h.b16 %v1285
    %v1323 = vunpack.c.l.b16 %v1286
    %v1324 = vunpack.c.h.b16 %v1286
    %v1325 = vunpack.c.l.b16 %v1287
    %v1326 = vunpack.c.h.b16 %v1287
    %v1327 = vunpack.c.l.b16 %v1288
    %v1328 = vunpack.c.h.b16 %v1288
    %v1329 = vunpack.c.l.b16 %v1289
    %v1330 = vunpack.c.h.b16 %v1289
    %v1331 = vunpack.c.l.b16 %v1290
    %v1332 = vunpack.c.h.b16 %v1290
    %v1333 = vunpack.c.l.b16 %v1291
    %v1334 = vunpack.c.h.b16 %v1291
    %v1335 = vunpack.c.l.b16 %v1292
    %v1336 = vunpack.c.h.b16 %v1292
    %v1337 = vunpack.c.l.b16 %v1293
    %v1338 = vunpack.c.h.b16 %v1293
    %v1339 = vunpack.c.l.b16 %v1294
    %v1340 = vunpack.c.h.b16 %v1294
    %v1341 = vunpack.c.l.b16 %v1295
    %v1342 = vunpack.c.h.b16 %v1295
    %v1343 = vunpack.c.l.b16 %v1296
    %v1344 = vunpack.c.h.b16 %v1296
    %v1345 = vpack.c.b16 %v1315, %v1313
    %v1346 = vpack.c.b16 %v1316, %v1314
    %v1347 = vpack.c.b16 %v1319, %v1317
    %v1348 = vpack.c.b16 %v1320, %v1318
    %v1349 = vpack.c.b16 %v1323, %v1321
    %v1350 = vpack.c.b16 %v1324, %v1322
    %v1351 = vpack.c.b16 %v1327, %v1325
    %v1352 = vpack.c.b16 %v1328, %v1326
    %v1353 = vpack.c.b16 %v1331, %v1329
    %v1354 = vpack.c.b16 %v1332, %v1330
    %v1355 = vpack.c.b16 %v1335, %v1333
    %v1356 = vpack.c.b16 %v1336, %v1334
    %v1357 = vpack.c.b16 %v1339, %v1337
    %v1358 = vpack.c.b16 %v1340, %v1338
    %v1359 = vpack.c.b16 %v1343, %v1341
    %v1360 = vpack.c.b16 %v1344, %v1342
    %1377 = vmatprep.subr.bf16.mxu0 %v1360
    %1378 = vmatpush1.bf16.msra.mxu0 %v1359
    %1379 = vmatprep.subr.bf16.mxu0 %v1358
    %1380 = vmatpush1.bf16.msra.mxu0 %v1357
    %1381 = vmatprep.subr.bf16.mxu0 %v1356
    %1382 = vmatpush1.bf16.msra.mxu0 %v1355
    %1383 = vmatprep.subr.bf16.mxu0 %v1354
    %1384 = vmatpush1.bf16.msra.mxu0 %v1353
    %1385 = vmatprep.subr.bf16.mxu0 %v1352
    %1386 = vmatpush1.bf16.msra.mxu0 %v1351
    %1387 = vmatprep.subr.bf16.mxu0 %v1350
    %1388 = vmatpush1.bf16.msra.mxu0 %v1349
    %1389 = vmatprep.subr.bf16.mxu0 %v1348
    %1390 = vmatpush1.bf16.msra.mxu0 %v1347
    %1391 = vmatprep.subr.bf16.mxu0 %v1346
    %1392 = vmatpush1.bf16.msra.mxu0 %v1345
    %1393 = vmatprep.subr.bf16.mxu0 0
    %1394 = vmatpush2.bf16.msra.mxu0 0
    %1395 = vmatprep.subr.bf16.mxu0 0
    %1396 = vmatpush2.bf16.msra.mxu0 0
    %1397 = vmatprep.subr.bf16.mxu0 0
    %1398 = vmatpush2.bf16.msra.mxu0 0
    %1399 = vmatprep.subr.bf16.mxu0 0
    %1400 = vmatpush2.bf16.msra.mxu0 0
    %1401 = vmatprep.subr.bf16.mxu0 0
    %1402 = vmatpush2.bf16.msra.mxu0 0
    %1403 = vmatprep.subr.bf16.mxu0 0
    %1404 = vmatpush2.bf16.msra.mxu0 0
    %1405 = vmatprep.subr.bf16.mxu0 0
    %1406 = vmatpush2.bf16.msra.mxu0 0
    %1407 = vmatprep.subr.bf16.mxu0 0
    %1408 = vmatpush2.bf16.msra.mxu0 0
    %1409 = vmatprep.mubr.bf16.mxu0 0
    %1410 = vmatmul.mubr.bf16.gmra.mxu0 %v1279
    %v1411 = vpop.f32.mrf.mxu0
    %v1412 = vadd.f32 0.0, %v1411
    %v1413 = vpop.f32.mrf.mxu0
    %v1414 = vadd.f32 0.0, %v1413
    %v1415 = vpop.f32.mrf.mxu0
    %v1416 = vadd.f32 0.0, %v1415
    %v1417 = vpop.f32.mrf.mxu0
    %v1418 = vadd.f32 0.0, %v1417
    %1419 = vdwg.mxu0
    %v1420 = vadd.f32 %v1273, %v1412
    %v1421 = vadd.f32 %v1274, %v1414
    %v1422 = vadd.f32 %v1275, %v1416
    %v1423 = vadd.f32 %v1276, %v1418
    %v1424 = vld [vmem:[%s4] sm:$0x3]
    %v1426 = vlaneseq
    %v1427 = vshrl.u32 %v1426, 7
    %v1428 = vsub.s32 0, %v1427
    %v1429 = vrot.slane %v1424, %v1428
    %v1430 = vlaneseq
    %v1431 = vshrl.u32 %v1430, 7
    %v1432 = vsub.s32 1, %v1431
    %v1433 = vrot.slane %v1424, %v1432
    %v1436 = vadd.f32 %v1420, %v1429
    %v1437 = vadd.f32 %v1421, %v1433
    %v1438 = vadd.f32 %v1422, %v1429
    %v1439 = vadd.f32 %v1423, %v1433
    %v1440 = vmax.f32 %v1436, %v1437
    %v1441 = vmax.f32 %v1438, %v1439
    %1442 = vst [vmem:[#allocation4] sm:$0xff] %v1440
    %1443 = vst [vmem:[#allocation4 + $0x8] sm:$0xff] %v1441
    %v1444 = vld [vmem:[#allocation4] ss:$2 sm:$0xf]
    %s1445 = scalar_lea.vmem [#allocation4], 8
    %v1446 = vld [vmem:[%s1445] ss:$2 sm:$0xf]
    %s1447 = scalar_lea.vmem [#allocation4], 1
    %v1448 = vld [vmem:[%s1447] ss:$2 sm:$0xf]
    %s1449 = scalar_lea.vmem [#allocation4], 9
    %v1450 = vld [vmem:[%s1449] ss:$2 sm:$0xf]
    %v1451 = vmax.f32 %v1444, %v1448
    %v1452 = vmax.f32 %v1446, %v1450
    %v1453 = vmax.f32 %v1451, 0.0
    %v1454 = vmax.f32 %v1452, 0.0
    %v1455 = vpack.c.bf16 %v1453, %v1453
    %v1456 = vpack.c.bf16 %v1454, %v1454
    %v1457 = vld [vmem:[%s5] sm:$0xf]
    %v1458 = vld [vmem:[%s5 + $0x4] sm:$0xf]
    %v1459 = vld [vmem:[%s5 + $0x8] sm:$0xf]
    %v1460 = vld [vmem:[%s5 + $0xc] sm:$0xf]
    %v1461 = vld [vmem:[%s5 + $0x10] sm:$0xf]
    %v1462 = vld [vmem:[%s5 + $0x14] sm:$0xf]
    %v1463 = vld [vmem:[%s5 + $0x18] sm:$0xf]
    %v1464 = vld [vmem:[%s5 + $0x1c] sm:$0xf]
    %v1465 = vld [vmem:[%s5 + $0x20] sm:$0xf]
    %v1466 = vld [vmem:[%s5 + $0x24] sm:$0xf]
    %v1467 = vld [vmem:[%s5 + $0x28] sm:$0xf]
    %v1468 = vld [vmem:[%s5 + $0x2c] sm:$0xf]
    %v1469 = vld [vmem:[%s5 + $0x30] sm:$0xf]
    %v1470 = vld [vmem:[%s5 + $0x34] sm:$0xf]
    %v1471 = vld [vmem:[%s5 + $0x38] sm:$0xf]
    %v1472 = vld [vmem:[%s5 + $0x3c] sm:$0xf]
    %s1473 = scalar_lea.vmem %s5, 64
    %v1474 = vld [vmem:[%s1473] sm:$0xf]
    %v1475 = vld [vmem:[%s1473 + $0x4] sm:$0xf]
    %v1476 = vld [vmem:[%s1473 + $0x8] sm:$0xf]
    %v1477 = vld [vmem:[%s1473 + $0xc] sm:$0xf]
    %v1478 = vld [vmem:[%s1473 + $0x10] sm:$0xf]
    %v1479 = vld [vmem:[%s1473 + $0x14] sm:$0xf]
    %v1480 = vld [vmem:[%s1473 + $0x18] sm:$0xf]
    %v1481 = vld [vmem:[%s1473 + $0x1c] sm:$0xf]
    %v1482 = vld [vmem:[%s1473 + $0x20] sm:$0xf]
    %v1483 = vld [vmem:[%s1473 + $0x24] sm:$0xf]
    %v1484 = vld [vmem:[%s1473 + $0x28] sm:$0xf]
    %v1485 = vld [vmem:[%s1473 + $0x2c] sm:$0xf]
    %v1486 = vld [vmem:[%s1473 + $0x30] sm:$0xf]
    %v1487 = vld [vmem:[%s1473 + $0x34] sm:$0xf]
    %v1488 = vld [vmem:[%s1473 + $0x38] sm:$0xf]
    %v1489 = vld [vmem:[%s1473 + $0x3c] sm:$0xf]
    %v1492 = vunpack.c.l.b16 %v1455
    %v1493 = vunpack.c.l.b16 %v1456
    %v1494 = vrot.slane %v1492, 1
    %vm1495 = vcmask 1041409
    %v1496 = vsel %vm1495, %v1493, %v1494
    %v1497 = vpack.c.b16 %v1496, %v1496
    %v1515 = vunpack.c.l.b16 %v1474
    %v1516 = vunpack.c.l.b16 %v1475
    %v1517 = vunpack.c.l.b16 %v1476
    %v1518 = vunpack.c.l.b16 %v1477
    %v1519 = vunpack.c.l.b16 %v1478
    %v1520 = vunpack.c.l.b16 %v1479
    %v1521 = vunpack.c.l.b16 %v1480
    %v1522 = vunpack.c.l.b16 %v1481
    %v1523 = vunpack.c.l.b16 %v1482
    %v1524 = vunpack.c.l.b16 %v1483
    %v1525 = vunpack.c.l.b16 %v1484
    %v1526 = vunpack.c.l.b16 %v1485
    %v1527 = vunpack.c.l.b16 %v1486
    %v1528 = vunpack.c.l.b16 %v1487
    %v1529 = vunpack.c.l.b16 %v1488
    %v1530 = vunpack.c.l.b16 %v1489
    %v1531 = vpack.c.b16 %v1516, %v1515
    %v1532 = vpack.c.b16 %v1518, %v1517
    %v1533 = vpack.c.b16 %v1520, %v1519
    %v1534 = vpack.c.b16 %v1522, %v1521
    %v1535 = vpack.c.b16 %v1524, %v1523
    %v1536 = vpack.c.b16 %v1526, %v1525
    %v1537 = vpack.c.b16 %v1528, %v1527
    %v1538 = vpack.c.b16 %v1530, %v1529
    %1547 = vmatprep.subr.bf16.mxu0 0
    %1548 = vmatpush1.bf16.msra.mxu0 %v1538
    %1549 = vmatprep.subr.bf16.mxu0 0
    %1550 = vmatpush1.bf16.msra.mxu0 %v1537
    %1551 = vmatprep.subr.bf16.mxu0 0
    %1552 = vmatpush1.bf16.msra.mxu0 %v1536
    %1553 = vmatprep.subr.bf16.mxu0 0
    %1554 = vmatpush1.bf16.msra.mxu0 %v1535
    %1555 = vmatprep.subr.bf16.mxu0 0
    %1556 = vmatpush1.bf16.msra.mxu0 %v1534
    %1557 = vmatprep.subr.bf16.mxu0 0
    %1558 = vmatpush1.bf16.msra.mxu0 %v1533
    %1559 = vmatprep.subr.bf16.mxu0 0
    %1560 = vmatpush1.bf16.msra.mxu0 %v1532
    %1561 = vmatprep.subr.bf16.mxu0 0
    %1562 = vmatpush1.bf16.msra.mxu0 %v1531
    %1563 = vmatprep.subr.bf16.mxu0 0
    %1564 = vmatpush2.bf16.msra.mxu0 0
    %1565 = vmatprep.subr.bf16.mxu0 0
    %1566 = vmatpush2.bf16.msra.mxu0 0
    %1567 = vmatprep.subr.bf16.mxu0 0
    %1568 = vmatpush2.bf16.msra.mxu0 0
    %1569 = vmatprep.subr.bf16.mxu0 0
    %1570 = vmatpush2.bf16.msra.mxu0 0
    %1571 = vmatprep.subr.bf16.mxu0 0
    %1572 = vmatpush2.bf16.msra.mxu0 0
    %1573 = vmatprep.subr.bf16.mxu0 0
    %1574 = vmatpush2.bf16.msra.mxu0 0
    %1575 = vmatprep.subr.bf16.mxu0 0
    %1576 = vmatpush2.bf16.msra.mxu0 0
    %1577 = vmatprep.subr.bf16.mxu0 0
    %1578 = vmatpush2.bf16.msra.mxu0 0
    %1579 = vmatprep.mubr.bf16.mxu0 0
    %1580 = vmatmul.mubr.bf16.gmra.mxu0 %v1497
    %v1581 = vpop.f32.mrf.mxu0
    %v1582 = vadd.f32 0.0, %v1581
    %v1583 = vpop.f32.mrf.mxu0
    %v1584 = vpop.f32.mrf.mxu0
    %v1585 = vpop.f32.mrf.mxu0
    %1586 = vdwg.mxu0
    %v1587 = vrot.slane %v1493, 7
    %v1588 = vsel %vm1495, %v1587, %v1492
    %v1589 = vpack.c.b16 %v1588, %v1588
    %v1607 = vunpack.c.l.b16 %v1457
    %v1608 = vunpack.c.l.b16 %v1458
    %v1609 = vunpack.c.l.b16 %v1459
    %v1610 = vunpack.c.l.b16 %v1460
    %v1611 = vunpack.c.l.b16 %v1461
    %v1612 = vunpack.c.l.b16 %v1462
    %v1613 = vunpack.c.l.b16 %v1463
    %v1614 = vunpack.c.l.b16 %v1464
    %v1615 = vunpack.c.l.b16 %v1465
    %v1616 = vunpack.c.l.b16 %v1466
    %v1617 = vunpack.c.l.b16 %v1467
    %v1618 = vunpack.c.l.b16 %v1468
    %v1619 = vunpack.c.l.b16 %v1469
    %v1620 = vunpack.c.l.b16 %v1470
    %v1621 = vunpack.c.l.b16 %v1471
    %v1622 = vunpack.c.l.b16 %v1472
    %v1623 = vpack.c.b16 %v1608, %v1607
    %v1624 = vpack.c.b16 %v1610, %v1609
    %v1625 = vpack.c.b16 %v1612, %v1611
    %v1626 = vpack.c.b16 %v1614, %v1613
    %v1627 = vpack.c.b16 %v1616, %v1615
    %v1628 = vpack.c.b16 %v1618, %v1617
    %v1629 = vpack.c.b16 %v1620, %v1619
    %v1630 = vpack.c.b16 %v1622, %v1621
    %1639 = vmatprep.subr.bf16.mxu0 0
    %1640 = vmatpush1.bf16.msra.mxu0 %v1630
    %1641 = vmatprep.subr.bf16.mxu0 0
    %1642 = vmatpush1.bf16.msra.mxu0 %v1629
    %1643 = vmatprep.subr.bf16.mxu0 0
    %1644 = vmatpush1.bf16.msra.mxu0 %v1628
    %1645 = vmatprep.subr.bf16.mxu0 0
    %1646 = vmatpush1.bf16.msra.mxu0 %v1627
    %1647 = vmatprep.subr.bf16.mxu0 0
    %1648 = vmatpush1.bf16.msra.mxu0 %v1626
    %1649 = vmatprep.subr.bf16.mxu0 0
    %1650 = vmatpush1.bf16.msra.mxu0 %v1625
    %1651 = vmatprep.subr.bf16.mxu0 0
    %1652 = vmatpush1.bf16.msra.mxu0 %v1624
    %1653 = vmatprep.subr.bf16.mxu0 0
    %1654 = vmatpush1.bf16.msra.mxu0 %v1623
    %1655 = vmatprep.subr.bf16.mxu0 0
    %1656 = vmatpush2.bf16.msra.mxu0 0
    %1657 = vmatprep.subr.bf16.mxu0 0
    %1658 = vmatpush2.bf16.msra.mxu0 0
    %1659 = vmatprep.subr.bf16.mxu0 0
    %1660 = vmatpush2.bf16.msra.mxu0 0
    %1661 = vmatprep.subr.bf16.mxu0 0
    %1662 = vmatpush2.bf16.msra.mxu0 0
    %1663 = vmatprep.subr.bf16.mxu0 0
    %1664 = vmatpush2.bf16.msra.mxu0 0
    %1665 = vmatprep.subr.bf16.mxu0 0
    %1666 = vmatpush2.bf16.msra.mxu0 0
    %1667 = vmatprep.subr.bf16.mxu0 0
    %1668 = vmatpush2.bf16.msra.mxu0 0
    %1669 = vmatprep.subr.bf16.mxu0 0
    %1670 = vmatpush2.bf16.msra.mxu0 0
    %1671 = vmatprep.mubr.bf16.mxu0 0
    %1672 = vmatmul.mubr.bf16.gmra.mxu0 %v1589
    %v1673 = vpop.f32.mrf.mxu0
    %v1674 = vadd.f32 %v1582, %v1673
    %v1675 = vpop.f32.mrf.mxu0
    %v1676 = vpop.f32.mrf.mxu0
    %v1677 = vpop.f32.mrf.mxu0
    %1678 = vdwg.mxu0
    %s1679 = scalar_lea.vmem %s5, 128
    %v1680 = vld [vmem:[%s1679] sm:$0xf]
    %v1681 = vld [vmem:[%s1679 + $0x4] sm:$0xf]
    %v1682 = vld [vmem:[%s1679 + $0x8] sm:$0xf]
    %v1683 = vld [vmem:[%s1679 + $0xc] sm:$0xf]
    %v1684 = vld [vmem:[%s1679 + $0x10] sm:$0xf]
    %v1685 = vld [vmem:[%s1679 + $0x14] sm:$0xf]
    %v1686 = vld [vmem:[%s1679 + $0x18] sm:$0xf]
    %v1687 = vld [vmem:[%s1679 + $0x1c] sm:$0xf]
    %v1688 = vld [vmem:[%s1679 + $0x20] sm:$0xf]
    %v1689 = vld [vmem:[%s1679 + $0x24] sm:$0xf]
    %v1690 = vld [vmem:[%s1679 + $0x28] sm:$0xf]
    %v1691 = vld [vmem:[%s1679 + $0x2c] sm:$0xf]
    %v1692 = vld [vmem:[%s1679 + $0x30] sm:$0xf]
    %v1693 = vld [vmem:[%s1679 + $0x34] sm:$0xf]
    %v1694 = vld [vmem:[%s1679 + $0x38] sm:$0xf]
    %v1695 = vld [vmem:[%s1679 + $0x3c] sm:$0xf]
    %v1696 = vrot.slane %v1492, 2
    %v1697 = vrot.slane %v1493, 1
    %v1698 = vsel %vm1495, %v1697, %v1696
    %v1699 = vpack.c.b16 %v1698, %v1698
    %v1717 = vunpack.c.l.b16 %v1680
    %v1718 = vunpack.c.l.b16 %v1681
    %v1719 = vunpack.c.l.b16 %v1682
    %v1720 = vunpack.c.l.b16 %v1683
    %v1721 = vunpack.c.l.b16 %v1684
    %v1722 = vunpack.c.l.b16 %v1685
    %v1723 = vunpack.c.l.b16 %v1686
    %v1724 = vunpack.c.l.b16 %v1687
    %v1725 = vunpack.c.l.b16 %v1688
    %v1726 = vunpack.c.l.b16 %v1689
    %v1727 = vunpack.c.l.b16 %v1690
    %v1728 = vunpack.c.l.b16 %v1691
    %v1729 = vunpack.c.l.b16 %v1692
    %v1730 = vunpack.c.l.b16 %v1693
    %v1731 = vunpack.c.l.b16 %v1694
    %v1732 = vunpack.c.l.b16 %v1695
    %v1733 = vpack.c.b16 %v1718, %v1717
    %v1734 = vpack.c.b16 %v1720, %v1719
    %v1735 = vpack.c.b16 %v1722, %v1721
    %v1736 = vpack.c.b16 %v1724, %v1723
    %v1737 = vpack.c.b16 %v1726, %v1725
    %v1738 = vpack.c.b16 %v1728, %v1727
    %v1739 = vpack.c.b16 %v1730, %v1729
    %v1740 = vpack.c.b16 %v1732, %v1731
    %1749 = vmatprep.subr.bf16.mxu0 0
    %1750 = vmatpush1.bf16.msra.mxu0 %v1740
    %1751 = vmatprep.subr.bf16.mxu0 0
    %1752 = vmatpush1.bf16.msra.mxu0 %v1739
    %1753 = vmatprep.subr.bf16.mxu0 0
    %1754 = vmatpush1.bf16.msra.mxu0 %v1738
    %1755 = vmatprep.subr.bf16.mxu0 0
    %1756 = vmatpush1.bf16.msra.mxu0 %v1737
    %1757 = vmatprep.subr.bf16.mxu0 0
    %1758 = vmatpush1.bf16.msra.mxu0 %v1736
    %1759 = vmatprep.subr.bf16.mxu0 0
    %1760 = vmatpush1.bf16.msra.mxu0 %v1735
    %1761 = vmatprep.subr.bf16.mxu0 0
    %1762 = vmatpush1.bf16.msra.mxu0 %v1734
    %1763 = vmatprep.subr.bf16.mxu0 0
    %1764 = vmatpush1.bf16.msra.mxu0 %v1733
    %1765 = vmatprep.subr.bf16.mxu0 0
    %1766 = vmatpush2.bf16.msra.mxu0 0
    %1767 = vmatprep.subr.bf16.mxu0 0
    %1768 = vmatpush2.bf16.msra.mxu0 0
    %1769 = vmatprep.subr.bf16.mxu0 0
    %1770 = vmatpush2.bf16.msra.mxu0 0
    %1771 = vmatprep.subr.bf16.mxu0 0
    %1772 = vmatpush2.bf16.msra.mxu0 0
    %1773 = vmatprep.subr.bf16.mxu0 0
    %1774 = vmatpush2.bf16.msra.mxu0 0
    %1775 = vmatprep.subr.bf16.mxu0 0
    %1776 = vmatpush2.bf16.msra.mxu0 0
    %1777 = vmatprep.subr.bf16.mxu0 0
    %1778 = vmatpush2.bf16.msra.mxu0 0
    %1779 = vmatprep.subr.bf16.mxu0 0
    %1780 = vmatpush2.bf16.msra.mxu0 0
    %1781 = vmatprep.mubr.bf16.mxu0 0
    %1782 = vmatmul.mubr.bf16.gmra.mxu0 %v1699
    %v1783 = vpop.f32.mrf.mxu0
    %v1784 = vadd.f32 0.0, %v1783
    %v1785 = vpop.f32.mrf.mxu0
    %v1786 = vpop.f32.mrf.mxu0
    %v1787 = vpop.f32.mrf.mxu0
    %1788 = vdwg.mxu0
    %v1789 = vadd.f32 %v1674, %v1784
    %s1790 = scalar_lea.vmem %s5, 192
    %v1791 = vld [vmem:[%s1790] sm:$0xf]
    %v1792 = vld [vmem:[%s1790 + $0x4] sm:$0xf]
    %v1793 = vld [vmem:[%s1790 + $0x8] sm:$0xf]
    %v1794 = vld [vmem:[%s1790 + $0xc] sm:$0xf]
    %v1795 = vld [vmem:[%s1790 + $0x10] sm:$0xf]
    %v1796 = vld [vmem:[%s1790 + $0x14] sm:$0xf]
    %v1797 = vld [vmem:[%s1790 + $0x18] sm:$0xf]
    %v1798 = vld [vmem:[%s1790 + $0x1c] sm:$0xf]
    %v1799 = vld [vmem:[%s1790 + $0x20] sm:$0xf]
    %v1800 = vld [vmem:[%s1790 + $0x24] sm:$0xf]
    %v1801 = vld [vmem:[%s1790 + $0x28] sm:$0xf]
    %v1802 = vld [vmem:[%s1790 + $0x2c] sm:$0xf]
    %v1803 = vld [vmem:[%s1790 + $0x30] sm:$0xf]
    %v1804 = vld [vmem:[%s1790 + $0x34] sm:$0xf]
    %v1805 = vld [vmem:[%s1790 + $0x38] sm:$0xf]
    %v1806 = vld [vmem:[%s1790 + $0x3c] sm:$0xf]
    %v1807 = vrot.slane %v1492, 3
    %v1808 = vrot.slane %v1493, 2
    %v1809 = vsel %vm1495, %v1808, %v1807
    %v1810 = vpack.c.b16 %v1809, %v1809
    %v1828 = vunpack.c.l.b16 %v1791
    %v1829 = vunpack.c.l.b16 %v1792
    %v1830 = vunpack.c.l.b16 %v1793
    %v1831 = vunpack.c.l.b16 %v1794
    %v1832 = vunpack.c.l.b16 %v1795
    %v1833 = vunpack.c.l.b16 %v1796
    %v1834 = vunpack.c.l.b16 %v1797
    %v1835 = vunpack.c.l.b16 %v1798
    %v1836 = vunpack.c.l.b16 %v1799
    %v1837 = vunpack.c.l.b16 %v1800
    %v1838 = vunpack.c.l.b16 %v1801
    %v1839 = vunpack.c.l.b16 %v1802
    %v1840 = vunpack.c.l.b16 %v1803
    %v1841 = vunpack.c.l.b16 %v1804
    %v1842 = vunpack.c.l.b16 %v1805
    %v1843 = vunpack.c.l.b16 %v1806
    %v1844 = vpack.c.b16 %v1829, %v1828
    %v1845 = vpack.c.b16 %v1831, %v1830
    %v1846 = vpack.c.b16 %v1833, %v1832
    %v1847 = vpack.c.b16 %v1835, %v1834
    %v1848 = vpack.c.b16 %v1837, %v1836
    %v1849 = vpack.c.b16 %v1839, %v1838
    %v1850 = vpack.c.b16 %v1841, %v1840
    %v1851 = vpack.c.b16 %v1843, %v1842
    %1860 = vmatprep.subr.bf16.mxu0 0
    %1861 = vmatpush1.bf16.msra.mxu0 %v1851
    %1862 = vmatprep.subr.bf16.mxu0 0
    %1863 = vmatpush1.bf16.msra.mxu0 %v1850
    %1864 = vmatprep.subr.bf16.mxu0 0
    %1865 = vmatpush1.bf16.msra.mxu0 %v1849
    %1866 = vmatprep.subr.bf16.mxu0 0
    %1867 = vmatpush1.bf16.msra.mxu0 %v1848
    %1868 = vmatprep.subr.bf16.mxu0 0
    %1869 = vmatpush1.bf16.msra.mxu0 %v1847
    %1870 = vmatprep.subr.bf16.mxu0 0
    %1871 = vmatpush1.bf16.msra.mxu0 %v1846
    %1872 = vmatprep.subr.bf16.mxu0 0
    %1873 = vmatpush1.bf16.msra.mxu0 %v1845
    %1874 = vmatprep.subr.bf16.mxu0 0
    %1875 = vmatpush1.bf16.msra.mxu0 %v1844
    %1876 = vmatprep.subr.bf16.mxu0 0
    %1877 = vmatpush2.bf16.msra.mxu0 0
    %1878 = vmatprep.subr.bf16.mxu0 0
    %1879 = vmatpush2.bf16.msra.mxu0 0
    %1880 = vmatprep.subr.bf16.mxu0 0
    %1881 = vmatpush2.bf16.msra.mxu0 0
    %1882 = vmatprep.subr.bf16.mxu0 0
    %1883 = vmatpush2.bf16.msra.mxu0 0
    %1884 = vmatprep.subr.bf16.mxu0 0
    %1885 = vmatpush2.bf16.msra.mxu0 0
    %1886 = vmatprep.subr.bf16.mxu0 0
    %1887 = vmatpush2.bf16.msra.mxu0 0
    %1888 = vmatprep.subr.bf16.mxu0 0
    %1889 = vmatpush2.bf16.msra.mxu0 0
    %1890 = vmatprep.subr.bf16.mxu0 0
    %1891 = vmatpush2.bf16.msra.mxu0 0
    %1892 = vmatprep.mubr.bf16.mxu0 0
    %1893 = vmatmul.mubr.bf16.gmra.mxu0 %v1810
    %v1894 = vpop.f32.mrf.mxu0
    %v1895 = vadd.f32 0.0, %v1894
    %v1896 = vpop.f32.mrf.mxu0
    %v1897 = vpop.f32.mrf.mxu0
    %v1898 = vpop.f32.mrf.mxu0
    %1899 = vdwg.mxu0
    %v1900 = vadd.f32 %v1789, %v1895
    %v1901 = vld [vmem:[%s6] sm:$0x1]
    %v1903 = vlaneseq
    %v1904 = vshrl.u32 %v1903, 7
    %v1905 = vsub.s32 0, %v1904
    %v1906 = vrot.slane %v1901, %v1905
    %v1908 = vadd.f32 %v1900, %v1906
    %v1909 = vmax.f32 %v1908, 0.0
    %v1910 = vpack.c.bf16 %v1909, %v1909
    %v1911 = vld [vmem:[%s7] sm:$0xf]
    %v1912 = vld [vmem:[%s7 + $0x4] sm:$0xf]
    %v1913 = vld [vmem:[%s7 + $0x8] sm:$0xf]
    %v1914 = vld [vmem:[%s7 + $0xc] sm:$0xf]
    %v1915 = vld [vmem:[%s7 + $0x10] sm:$0xf]
    %v1916 = vld [vmem:[%s7 + $0x14] sm:$0xf]
    %v1917 = vld [vmem:[%s7 + $0x18] sm:$0x1]
    %v1918 = vld [vmem:[%s8] sm:$0x1]
    %v1920 = vlaneseq
    %v1921 = vshrl.u32 %v1920, 7
    %v1922 = vsub.s32 0, %v1921
    %v1923 = vrot.slane %v1918, %v1922
    %v1932 = vunpack.c.l.b16 %v1911
    %v1933 = vunpack.c.l.b16 %v1912
    %v1934 = vunpack.c.l.b16 %v1913
    %v1935 = vunpack.c.l.b16 %v1914
    %v1936 = vunpack.c.l.b16 %v1915
    %v1937 = vunpack.c.l.b16 %v1916
    %v1938 = vunpack.c.l.b16 %v1917
    %v1939 = vpack.c.b16 %v1933, %v1932
    %v1940 = vpack.c.b16 %v1935, %v1934
    %v1941 = vpack.c.b16 %v1937, %v1936
    %v1942 = vpack.c.b16 %v1938, %v1938
    %vm1946 = vcmask 408576
    %v1948 = vsel %vm1946, %v1910, 0
    %vm1950 = vcmask 1040384
    %v1952 = vsel %vm1950, %v1942, 0
    %1954 = vmatprep.subr.bf16.mxu0 0
    %1955 = vmatpush1.bf16.msra.mxu0 0
    %1956 = vmatprep.subr.bf16.mxu0 0
    %1957 = vmatpush1.bf16.msra.mxu0 0
    %1958 = vmatprep.subr.bf16.mxu0 0
    %1959 = vmatpush1.bf16.msra.mxu0 0
    %1960 = vmatprep.subr.bf16.mxu0 0
    %1961 = vmatpush1.bf16.msra.mxu0 0
    %1962 = vmatprep.subr.bf16.mxu0 0
    %1963 = vmatpush1.bf16.msra.mxu0 %v1952
    %1964 = vmatprep.subr.bf16.mxu0 0
    %1965 = vmatpush1.bf16.msra.mxu0 %v1941
    %1966 = vmatprep.subr.bf16.mxu0 0
    %1967 = vmatpush1.bf16.msra.mxu0 %v1940
    %1968 = vmatprep.subr.bf16.mxu0 0
    %1969 = vmatpush1.bf16.msra.mxu0 %v1939
    %1970 = vmatprep.subr.bf16.mxu0 0
    %1971 = vmatpush2.bf16.msra.mxu0 0
    %1972 = vmatprep.subr.bf16.mxu0 0
    %1973 = vmatpush2.bf16.msra.mxu0 0
    %1974 = vmatprep.subr.bf16.mxu0 0
    %1975 = vmatpush2.bf16.msra.mxu0 0
    %1976 = vmatprep.subr.bf16.mxu0 0
    %1977 = vmatpush2.bf16.msra.mxu0 0
    %1978 = vmatprep.subr.bf16.mxu0 0
    %1979 = vmatpush2.bf16.msra.mxu0 0
    %1980 = vmatprep.subr.bf16.mxu0 0
    %1981 = vmatpush2.bf16.msra.mxu0 0
    %1982 = vmatprep.subr.bf16.mxu0 0
    %1983 = vmatpush2.bf16.msra.mxu0 0
    %1984 = vmatprep.subr.bf16.mxu0 0
    %1985 = vmatpush2.bf16.msra.mxu0 0
    %1986 = vmatprep.mubr.bf16.mxu0 0
    %1987 = vmatmul.mubr.bf16.gmra.mxu0 %v1948
    %v1988 = vpop.f32.mrf.mxu0
    %v1989 = vadd.f32 %v1923, %v1988
    %v1990 = vpop.f32.mrf.mxu0
    %v1991 = vpop.f32.mrf.mxu0
    %v1992 = vpop.f32.mrf.mxu0
    %1993 = vdwg.mxu0
    %vm1994 = vcmask 1041408
    %v1995 = vsel %vm1994, %v1989, -inf
    %1996 = vmax.xlane.f32.xlu0 %v1995
    %v1997 = vpop.xlane.xlu0 %1996
    %v1998 = vsub.f32 %v1989, %v1997
    %v1999 = vmul.f32 %v1998, 1.442695
    %v2000 = vpow.pop %v1999
    %v2001 = vsel %vm1994, %v2000, 0.0
    %2002 = vadd.xlane.f32.xlu0 %v2001
    %v2003 = vpop.xlane.xlu0 %2002
    %v2004 = vlog2.pop %v2003
    %v2005 = vmul.f32 %v2004, 0.6931472
    %v2006 = vsub.f32 %v1998, %v2005
    %2007 = vst [vmem:[#allocation8] sm:$0x3] %v2006
    // Predicated region
    $region42: #{tpu_custom_call.1} parent=1 // pred_check
      _
    $region43: #{tpu_custom_call.1} parent=1 // pred_check_branch
      %2009 = sbr.rel (0) target = $region45
    $region44: #{tpu_custom_call.1} parent=1 // pred_region
      %s2011 = ssub.s32 32, 32
      %2012 = vsyncadd [#allocation7], %s2011
      %s2014 = sshll.u32 [#allocation8], 4
      %s2015 = int_to_ptr.vmem [resolvable:$true] %s2014
      %2017 = dma.vmem_to_hbm [thread:$0]  %s2015, 32, %s9, [#allocation7]
    $region45: #{tpu_custom_call.1} parent=1 // pred_fallthru
      _
    // Predicated region
    $region46: #{tpu_custom_call.1} parent=1 // pred_check
      _
    $region47: #{tpu_custom_call.1} parent=1 // pred_check_branch
      %2019 = sbr.rel (0) target = $region49
    $region48: #{tpu_custom_call.1} parent=1 // pred_region
      %2020 = dma.done [#allocation7], 32
    $region49: #{tpu_custom_call.1} parent=1 // pred_fallthru
      _
    %2021 = vsyncpa [#allocation6], 1
    %2022 = vsyncpa [#allocation7], 1

</llo_original>
